<compile_context>
chip_gen: v7x
topology: tpu7x:2x2x1
jax: 0.10.0
libtpu: 0.0.40
codegen_flags: <defaults>
</compile_context>

<pallas_src>
import jax
import jax.numpy as jnp
import numpy as np
from jax.experimental import pallas as pl
from jax.experimental.pallas import tpu as pltpu

# ---- module hyper-parameters (small, consistent with FFTBlock.__init__) ------------
D_MODEL = 32
D_INNER = 64
N_HEAD = 2
D_K = 16
D_V = 16
FFT_CONV1D_KERNEL = (9, 1)   # model_config.fft_conv1d_kernel (FastSpeech default)
LN_EPS = 1e-5
NEG_INF = -1e30              # stand-in for masked_fill(-inf); exp() underflows to 0 in f32

# offsets into the fused qkv projection output
_QOFF = 0
_KOFF = N_HEAD * D_K
_VOFF = 2 * N_HEAD * D_K


def _layer_norm(x, gamma, beta):
    mean = jnp.mean(x, axis=-1, keepdims=True)
    var = jnp.mean((x - mean) ** 2, axis=-1, keepdims=True)
    return (x - mean) * jax.lax.rsqrt(var + LN_EPS) * gamma + beta


# ------------------------- fused attention + feed-forward kernel --------------------
def _fft_block_kernel(x_ref, mask_ref, npm_ref,
                      wqkv_ref, bqkv_ref, wo_ref, bo_ref, g1_ref, be1_ref,
                      w1_ref, b1_ref, w2_ref, b2_ref, g2_ref, be2_ref,
                      out_ref, attn_ref):
    x = x_ref[0]                                   # (T, D_MODEL)
    mask = mask_ref[0]                             # (T, T), 1.0 == masked
    npm = npm_ref[0]                               # (T, 1) non_pad_mask
    T = x.shape[0]

    # ---------------- multi-head self-attention ----------------
    residual = x
    # fused Q/K/V projection: one (T, D) x (D, 3*H*Dk) matmul
    qkv = jnp.dot(x, wqkv_ref[...], preferred_element_type=jnp.float32) + bqkv_ref[0]
    inv_temp = 1.0 / float(np.sqrt(D_K))

    attn_out = jnp.zeros((T, D_MODEL), jnp.float32)
    for h in range(N_HEAD):                        # static unrolled loop over heads
        qh = qkv[:, _QOFF + h * D_K:_QOFF + (h + 1) * D_K]
        kh = qkv[:, _KOFF + h * D_K:_KOFF + (h + 1) * D_K]
        vh = qkv[:, _VOFF + h * D_V:_VOFF + (h + 1) * D_V]
        scores = jnp.dot(qh, kh.T, preferred_element_type=jnp.float32) * inv_temp
        scores = jnp.where(mask > 0.0, NEG_INF, scores)
        scores = scores - jnp.max(scores, axis=-1, keepdims=True)
        p = jnp.exp(scores)
        # exact divide: the approx EUP reciprocal previously used here caused a
        # ~6.5e-4 output error; this (T,T)=16x16 divide is not on the bottleneck.
        p = p / jnp.sum(p, axis=-1, keepdims=True)
        attn_ref[h, 0] = p                         # head-major write, no wrapper transpose
        ctx = jnp.dot(p, vh, preferred_element_type=jnp.float32)       # (T, D_V)
        # project through the matching W_o row-slice and accumulate (no lane concat)
        attn_out = attn_out + jnp.dot(ctx, wo_ref[h * D_V:(h + 1) * D_V, :],
                                      preferred_element_type=jnp.float32)
    attn_out = attn_out + bo_ref[0]
    y = _layer_norm(attn_out + residual, g1_ref[0], be1_ref[0]) * npm

    # ---------------- position-wise feed-forward ----------------
    residual = y
    k1 = FFT_CONV1D_KERNEL[0]
    pad = (k1 - 1) // 2
    yp = jnp.pad(y, ((pad, pad), (0, 0)))          # zero-pad along time, like Conv1d padding
    # im2col: conv1d(kernel=9) == single (T, 9*D) @ (9*D, D_inner) matmul
    cols = jnp.concatenate([yp[k:k + T, :] for k in range(k1)], axis=-1)
    hdn = jnp.dot(cols, w1_ref[...], preferred_element_type=jnp.float32) + b1_ref[0]
    hdn = jnp.maximum(hdn, 0.0)                    # ReLU
    # conv1d(kernel=1) == plain matmul
    out = jnp.dot(hdn, w2_ref[...], preferred_element_type=jnp.float32) + b2_ref[0]
    out = _layer_norm(out + residual, g2_ref[0], be2_ref[0]) * npm
    out_ref[0] = out


# ------------------------------------ wrapper ----------------------------------------
def fft_block(enc_input, non_pad_mask, slf_attn_mask, params):
    B, T, D = enc_input.shape
    assert D == D_MODEL

    # fuse / reshape weights once, outside the kernel
    wqkv = jnp.concatenate([params["wq"], params["wk"], params["wv"]], axis=1)  # (D, 3*H*Dk)
    bqkv = jnp.concatenate([params["bq"], params["bk"], params["bv"]], axis=1)  # (1, 3*H*Dk)
    w1_im2col = params["w1"].reshape(FFT_CONV1D_KERNEL[0] * D_MODEL, D_INNER)   # (9*D, D_inner)

    seq_spec = pl.BlockSpec((1, T, D_MODEL), lambda b: (b, 0, 0))
    mask_spec = pl.BlockSpec((1, T, T), lambda b: (b, 0, 0))
    npm_spec = pl.BlockSpec((1, T, 1), lambda b: (b, 0, 0))

    def full(arr):
        shape = arr.shape
        return pl.BlockSpec(shape, lambda b, _n=len(shape): (0,) * _n)

    out, attn_probs = pl.pallas_call(
        _fft_block_kernel,
        out_shape=(jax.ShapeDtypeStruct((B, T, D_MODEL), jnp.float32),
                   jax.ShapeDtypeStruct((N_HEAD, B, T, T), jnp.float32)),
        grid=(B,),
        in_specs=[seq_spec, mask_spec, npm_spec,
                  full(wqkv), full(bqkv),
                  full(params["wo"]), full(params["bo"]),
                  full(params["ln1_g"]), full(params["ln1_b"]),
                  full(w1_im2col), full(params["b1"]),
                  full(params["w2"]), full(params["b2"]),
                  full(params["ln2_g"]), full(params["ln2_b"])],
        out_specs=(pl.BlockSpec((1, T, D_MODEL), lambda b: (b, 0, 0)),
                   pl.BlockSpec((N_HEAD, 1, T, T), lambda b: (0, b, 0, 0))),
        compiler_params=pltpu.CompilerParams(dimension_semantics=("parallel",)),
    )(enc_input, slf_attn_mask, non_pad_mask,
      wqkv, bqkv, params["wo"], params["bo"], params["ln1_g"], params["ln1_b"],
      w1_im2col, params["b1"], params["w2"], params["b2"],
      params["ln2_g"], params["ln2_b"])

    # PyTorch MultiHeadAttention returns attn as (n_head * B, T, T), head-major.
    # Kernel already writes head-major -> pure reshape, no transpose/copy.
    enc_slf_attn = attn_probs.reshape(N_HEAD * B, T, T)
    return out, enc_slf_attn


# ------------------------------- pure-JAX reference ----------------------------------
def fft_block_ref(x, npm, mask, p):
    residual = x
    q = x @ p["wq"] + p["bq"][0]
    k = x @ p["wk"] + p["bk"][0]
    v = x @ p["wv"] + p["bv"][0]
    B, T, _ = x.shape
    qh = q.reshape(B, T, N_HEAD, D_K).transpose(0, 2, 1, 3)
    kh = k.reshape(B, T, N_HEAD, D_K).transpose(0, 2, 1, 3)
    vh = v.reshape(B, T, N_HEAD, D_V).transpose(0, 2, 1, 3)
    scores = jnp.einsum("bhqd,bhkd->bhqk", qh, kh) / np.power(D_K, 0.5)
    scores = jnp.where(mask[:, None] > 0.0, NEG_INF, scores)
    attn = jax.nn.softmax(scores, axis=-1)
    o = jnp.einsum("bhqk,bhkd->bhqd", attn, vh).transpose(0, 2, 1, 3).reshape(B, T, -1)
    o = o @ p["wo"] + p["bo"][0]
    o = _layer_norm(o + residual, p["ln1_g"][0], p["ln1_b"][0]) * npm

    residual = o
    k1 = FFT_CONV1D_KERNEL[0]
    pad = (k1 - 1) // 2
    xp = jnp.pad(o, ((0, 0), (pad, pad), (0, 0)))
    h = jnp.zeros((B, T, D_INNER)) + p["b1"][0]
    for kk in range(k1):
        h = h + jnp.einsum("btd,di->bti", xp[:, kk:kk + T, :], p["w1"][kk])
    h = jnp.maximum(h, 0.0)
    out = h @ p["w2"] + p["b2"][0]
    out = _layer_norm(out + residual, p["ln2_g"][0], p["ln2_b"][0]) * npm
    attn_flat = jnp.transpose(attn, (1, 0, 2, 3)).reshape(N_HEAD * B, T, T)
    return out, attn_flat


# ---------------------------------------- main ----------------------------------------
if __name__ == "__main__":
    key = jax.random.PRNGKey(0)
    ks = jax.random.split(key, 16)

    B, T = 2, 16

    def init(k, shape, scale=0.1):
        return (scale * jax.random.normal(k, shape)).astype(jnp.float32)

    params = {
        "wq": init(ks[0], (D_MODEL, N_HEAD * D_K)),
        "bq": init(ks[1], (1, N_HEAD * D_K)),
        "wk": init(ks[2], (D_MODEL, N_HEAD * D_K)),
        "bk": init(ks[3], (1, N_HEAD * D_K)),
        "wv": init(ks[4], (D_MODEL, N_HEAD * D_V)),
        "bv": init(ks[5], (1, N_HEAD * D_V)),
        "wo": init(ks[6], (N_HEAD * D_V, D_MODEL)),
        "bo": init(ks[7], (1, D_MODEL)),
        "ln1_g": jnp.ones((1, D_MODEL), jnp.float32),
        "ln1_b": jnp.zeros((1, D_MODEL), jnp.float32),
        # conv1 weight, PyTorch layout (d_inner, d_model, K) -> stored as (K, d_model, d_inner)
        "w1": init(ks[8], (FFT_CONV1D_KERNEL[0], D_MODEL, D_INNER)),
        "b1": init(ks[9], (1, D_INNER)),
        # conv2 weight, kernel=1: (d_model, d_inner, 1) -> stored as (d_inner, d_model)
        "w2": init(ks[10], (D_INNER, D_MODEL)),
        "b2": init(ks[11], (1, D_MODEL)),
        "ln2_g": jnp.ones((1, D_MODEL), jnp.float32),
        "ln2_b": jnp.zeros((1, D_MODEL), jnp.float32),
    }

    enc_input = jax.random.normal(ks[12], (B, T, D_MODEL), jnp.float32)

    # last 4 timesteps of batch 1 are padding
    lengths = jnp.array([T, T - 4])
    t_idx = jnp.arange(T)
    valid = (t_idx[None, :] < lengths[:, None]).astype(jnp.float32)        # (B, T)
    non_pad_mask = valid[:, :, None]                                       # (B, T, 1)
    slf_attn_mask = (1.0 - valid)[:, None, :] * jnp.ones((B, T, 1))        # (B, T, T), 1 == masked

    out, attn = fft_block(enc_input, non_pad_mask, slf_attn_mask, params)
    jax.block_until_ready(out)
    jax.block_until_ready(attn)

    out_ref, attn_ref = fft_block_ref(enc_input, non_pad_mask, slf_attn_mask, params)
    # exact softmax divide in-kernel -> differences are only f32 accumulation-order noise
    np.testing.assert_allclose(np.asarray(out), np.asarray(out_ref), rtol=1e-4, atol=1e-4)
    np.testing.assert_allclose(np.asarray(attn), np.asarray(attn_ref), rtol=1e-4, atol=1e-4)

    # TODO(synk): dropout layers are treated as identity (eval mode); training-mode dropout
    # would need pltpu.prng_* inside the kernel.
    print("KERNEL_OK")
</pallas_src>

<mosaic_0001>
module attributes {stable_mosaic.version = 11 : i64} {
  func.func @_fft_block_kernel(%arg0: i32, %arg1: memref<1x16x32xf32, #tpu.memory_space<vmem>>, %arg2: memref<1x16x16xf32, #tpu.memory_space<vmem>>, %arg3: memref<1x16x1xf32, #tpu.memory_space<vmem>>, %arg4: memref<32x96xf32, #tpu.memory_space<vmem>>, %arg5: memref<1x96xf32, #tpu.memory_space<vmem>>, %arg6: memref<32x32xf32, #tpu.memory_space<vmem>>, %arg7: memref<1x32xf32, #tpu.memory_space<vmem>>, %arg8: memref<1x32xf32, #tpu.memory_space<vmem>>, %arg9: memref<1x32xf32, #tpu.memory_space<vmem>>, %arg10: memref<288x64xf32, #tpu.memory_space<vmem>>, %arg11: memref<1x64xf32, #tpu.memory_space<vmem>>, %arg12: memref<64x32xf32, #tpu.memory_space<vmem>>, %arg13: memref<1x32xf32, #tpu.memory_space<vmem>>, %arg14: memref<1x32xf32, #tpu.memory_space<vmem>>, %arg15: memref<1x32xf32, #tpu.memory_space<vmem>>, %arg16: memref<1x16x32xf32, #tpu.memory_space<vmem>>, %arg17: memref<2x1x16x16xf32, #tpu.memory_space<vmem>>) attributes {dimension_semantics = [#tpu.dimension_semantics<parallel>], iteration_bounds = array<i64: 2>, scalar_prefetch = 0 : i64, scratch_operands = 0 : i64, tpu.core_type = #tpu.core_type<tc>, window_params = [{transform_indices = @transform_0, window_bounds = array<i64: 1, 16, 32>}, {transform_indices = @transform_1, window_bounds = array<i64: 1, 16, 16>}, {transform_indices = @transform_2, window_bounds = array<i64: 1, 16, 1>}, {pipeline_mode = #tpu.pipeline_mode<synchronous>, transform_indices = @transform_3, window_bounds = array<i64: 32, 96>}, {pipeline_mode = #tpu.pipeline_mode<synchronous>, transform_indices = @transform_4, window_bounds = array<i64: 1, 96>}, {pipeline_mode = #tpu.pipeline_mode<synchronous>, transform_indices = @transform_5, window_bounds = array<i64: 32, 32>}, {pipeline_mode = #tpu.pipeline_mode<synchronous>, transform_indices = @transform_6, window_bounds = array<i64: 1, 32>}, {pipeline_mode = #tpu.pipeline_mode<synchronous>, transform_indices = @transform_7, window_bounds = array<i64: 1, 32>}, {pipeline_mode = #tpu.pipeline_mode<synchronous>, transform_indices = @transform_8, window_bounds = array<i64: 1, 32>}, {pipeline_mode = #tpu.pipeline_mode<synchronous>, transform_indices = @transform_9, window_bounds = array<i64: 288, 64>}, {pipeline_mode = #tpu.pipeline_mode<synchronous>, transform_indices = @transform_10, window_bounds = array<i64: 1, 64>}, {pipeline_mode = #tpu.pipeline_mode<synchronous>, transform_indices = @transform_11, window_bounds = array<i64: 64, 32>}, {pipeline_mode = #tpu.pipeline_mode<synchronous>, transform_indices = @transform_12, window_bounds = array<i64: 1, 32>}, {pipeline_mode = #tpu.pipeline_mode<synchronous>, transform_indices = @transform_13, window_bounds = array<i64: 1, 32>}, {pipeline_mode = #tpu.pipeline_mode<synchronous>, transform_indices = @transform_14, window_bounds = array<i64: 1, 32>}, {transform_indices = @transform_15, window_bounds = array<i64: 1, 16, 32>}, {transform_indices = @transform_16, window_bounds = array<i64: 2, 1, 16, 16>}]} {
    %c0 = arith.constant 0 : index
    %c0_0 = arith.constant 0 : index
    %c0_1 = arith.constant 0 : index
    %0 = vector.load %arg1[%c0, %c0_0, %c0_1] : memref<1x16x32xf32, #tpu.memory_space<vmem>>, vector<1x16x32xf32>
    %1 = vector.shape_cast %0 : vector<1x16x32xf32> to vector<16x32xf32>
    %c0_2 = arith.constant 0 : index
    %c0_3 = arith.constant 0 : index
    %c0_4 = arith.constant 0 : index
    %2 = vector.load %arg2[%c0_2, %c0_3, %c0_4] : memref<1x16x16xf32, #tpu.memory_space<vmem>>, vector<1x16x16xf32>
    %3 = vector.shape_cast %2 : vector<1x16x16xf32> to vector<16x16xf32>
    %c0_5 = arith.constant 0 : index
    %c0_6 = arith.constant 0 : index
    %c0_7 = arith.constant 0 : index
    %4 = vector.load %arg3[%c0_5, %c0_6, %c0_7] : memref<1x16x1xf32, #tpu.memory_space<vmem>>, vector<1x16x1xf32>
    %5 = vector.shape_cast %4 : vector<1x16x1xf32> to vector<16x1xf32>
    %c0_8 = arith.constant 0 : index
    %c0_9 = arith.constant 0 : index
    %6 = vector.load %arg4[%c0_8, %c0_9] : memref<32x96xf32, #tpu.memory_space<vmem>>, vector<32x96xf32>
    %cst = arith.constant dense<0.000000e+00> : vector<16x96xf32>
    %7 = tpu.matmul %1, %6, %cst {dimension_numbers = #tpu.dot_dimension_numbers<[1], [0], [0], [1], [0, 0, 1, 1], [], []>} : vector<16x32xf32>, vector<32x96xf32>, vector<16x96xf32> -> vector<16x96xf32>
    %c0_10 = arith.constant 0 : index
    %c0_11 = arith.constant 0 : index
    %8 = vector.load %arg5[%c0_10, %c0_11] : memref<1x96xf32, #tpu.memory_space<vmem>>, vector<1x96xf32>
    %9 = vector.shape_cast %8 : vector<1x96xf32> to vector<96xf32>
    %10 = vector.shape_cast %9 : vector<96xf32> to vector<1x96xf32>
    %11 = vector.broadcast %10 : vector<1x96xf32> to vector<16x96xf32>
    %12 = arith.addf %7, %11 : vector<16x96xf32>
    %cst_12 = arith.constant 0.000000e+00 : f32
    %13 = vector.broadcast %cst_12 : f32 to vector<16x32xf32>
    %14 = vector.extract_strided_slice %12 {offsets = [0, 0], sizes = [16, 16], strides = [1, 1]} : vector<16x96xf32> to vector<16x16xf32>
    %15 = vector.extract_strided_slice %12 {offsets = [0, 32], sizes = [16, 16], strides = [1, 1]} : vector<16x96xf32> to vector<16x16xf32>
    %16 = vector.extract_strided_slice %12 {offsets = [0, 64], sizes = [16, 16], strides = [1, 1]} : vector<16x96xf32> to vector<16x16xf32>
    %17 = tpu.transpose %15, [1, 0] : vector<16x16xf32> -> vector<16x16xf32>
    %cst_13 = arith.constant dense<0.000000e+00> : vector<16x16xf32>
    %18 = tpu.matmul %14, %17, %cst_13 {dimension_numbers = #tpu.dot_dimension_numbers<[1], [0], [0], [1], [0, 0, 1, 1], [], []>} : vector<16x16xf32>, vector<16x16xf32>, vector<16x16xf32> -> vector<16x16xf32>
    %cst_14 = arith.constant 2.500000e-01 : f32
    %19 = vector.broadcast %cst_14 : f32 to vector<16x16xf32>
    %20 = arith.mulf %18, %19 : vector<16x16xf32>
    %cst_15 = arith.constant 0.000000e+00 : f32
    %21 = vector.broadcast %cst_15 : f32 to vector<16x16xf32>
    %22 = arith.cmpf ogt, %3, %21 : vector<16x16xf32>
    %cst_16 = arith.constant -1.000000e+30 : f32
    %23 = vector.broadcast %cst_16 : f32 to vector<16x16xf32>
    %24 = arith.select %22, %23, %20 : vector<16x16xi1>, vector<16x16xf32>
    %cst_17 = arith.constant dense<0xFF800000> : vector<16xf32>
    %25 = vector.multi_reduction <maximumf>, %24, %cst_17 [1] : vector<16x16xf32> to vector<16xf32>
    %26 = vector.shape_cast %25 : vector<16xf32> to vector<16x1xf32>
    %27 = vector.broadcast %26 : vector<16x1xf32> to vector<16x16xf32>
    %28 = arith.subf %24, %27 : vector<16x16xf32>
    %29 = math.exp %28 : vector<16x16xf32>
    %cst_18 = arith.constant dense<0.000000e+00> : vector<16xf32>
    %30 = vector.multi_reduction <add>, %29, %cst_18 [1] : vector<16x16xf32> to vector<16xf32>
    %31 = vector.shape_cast %30 : vector<16xf32> to vector<16x1xf32>
    %32 = vector.broadcast %31 : vector<16x1xf32> to vector<16x16xf32>
    %33 = arith.divf %29, %32 : vector<16x16xf32>
    %c0_19 = arith.constant 0 : index
    %c0_20 = arith.constant 0 : index
    %c0_21 = arith.constant 0 : index
    %c0_22 = arith.constant 0 : index
    %34 = vector.load %arg17[%c0_19, %c0_20, %c0_21, %c0_22] : memref<2x1x16x16xf32, #tpu.memory_space<vmem>>, vector<1x1x16x16xf32>
    %35 = vector.shape_cast %34 : vector<1x1x16x16xf32> to vector<16x16xf32>
    %36 = vector.shape_cast %33 : vector<16x16xf32> to vector<1x1x16x16xf32>
    tpu.vector_store %arg17[%c0_19, %c0_20, %c0_21, %c0_22], %36 {strides = array<i32>} : memref<2x1x16x16xf32, #tpu.memory_space<vmem>>, vector<1x1x16x16xf32>,
    %cst_23 = arith.constant dense<0.000000e+00> : vector<16x16xf32>
    %37 = tpu.matmul %33, %16, %cst_23 {dimension_numbers = #tpu.dot_dimension_numbers<[1], [0], [0], [1], [0, 0, 1, 1], [], []>} : vector<16x16xf32>, vector<16x16xf32>, vector<16x16xf32> -> vector<16x16xf32>
    %c0_24 = arith.constant 0 : index
    %c0_25 = arith.constant 0 : index
    %38 = vector.load %arg6[%c0_24, %c0_25] : memref<32x32xf32, #tpu.memory_space<vmem>>, vector<16x32xf32>
    %cst_26 = arith.constant dense<0.000000e+00> : vector<16x32xf32>
    %39 = tpu.matmul %37, %38, %cst_26 {dimension_numbers = #tpu.dot_dimension_numbers<[1], [0], [0], [1], [0, 0, 1, 1], [], []>} : vector<16x16xf32>, vector<16x32xf32>, vector<16x32xf32> -> vector<16x32xf32>
    %40 = arith.addf %13, %39 : vector<16x32xf32>
    %41 = vector.extract_strided_slice %12 {offsets = [0, 16], sizes = [16, 16], strides = [1, 1]} : vector<16x96xf32> to vector<16x16xf32>
    %42 = vector.extract_strided_slice %12 {offsets = [0, 48], sizes = [16, 16], strides = [1, 1]} : vector<16x96xf32> to vector<16x16xf32>
    %43 = vector.extract_strided_slice %12 {offsets = [0, 80], sizes = [16, 16], strides = [1, 1]} : vector<16x96xf32> to vector<16x16xf32>
    %44 = tpu.transpose %42, [1, 0] : vector<16x16xf32> -> vector<16x16xf32>
    %cst_27 = arith.constant dense<0.000000e+00> : vector<16x16xf32>
    %45 = tpu.matmul %41, %44, %cst_27 {dimension_numbers = #tpu.dot_dimension_numbers<[1], [0], [0], [1], [0, 0, 1, 1], [], []>} : vector<16x16xf32>, vector<16x16xf32>, vector<16x16xf32> -> vector<16x16xf32>
    %cst_28 = arith.constant 2.500000e-01 : f32
    %46 = vector.broadcast %cst_28 : f32 to vector<16x16xf32>
    %47 = arith.mulf %45, %46 : vector<16x16xf32>
    %cst_29 = arith.constant 0.000000e+00 : f32
    %48 = vector.broadcast %cst_29 : f32 to vector<16x16xf32>
    %49 = arith.cmpf ogt, %3, %48 : vector<16x16xf32>
    %cst_30 = arith.constant -1.000000e+30 : f32
    %50 = vector.broadcast %cst_30 : f32 to vector<16x16xf32>
    %51 = arith.select %49, %50, %47 : vector<16x16xi1>, vector<16x16xf32>
    %cst_31 = arith.constant dense<0xFF800000> : vector<16xf32>
    %52 = vector.multi_reduction <maximumf>, %51, %cst_31 [1] : vector<16x16xf32> to vector<16xf32>
    %53 = vector.shape_cast %52 : vector<16xf32> to vector<16x1xf32>
    %54 = vector.broadcast %53 : vector<16x1xf32> to vector<16x16xf32>
    %55 = arith.subf %51, %54 : vector<16x16xf32>
    %56 = math.exp %55 : vector<16x16xf32>
    %cst_32 = arith.constant dense<0.000000e+00> : vector<16xf32>
    %57 = vector.multi_reduction <add>, %56, %cst_32 [1] : vector<16x16xf32> to vector<16xf32>
    %58 = vector.shape_cast %57 : vector<16xf32> to vector<16x1xf32>
    %59 = vector.broadcast %58 : vector<16x1xf32> to vector<16x16xf32>
    %60 = arith.divf %56, %59 : vector<16x16xf32>
    %c1 = arith.constant 1 : index
    %c0_33 = arith.constant 0 : index
    %c0_34 = arith.constant 0 : index
    %c0_35 = arith.constant 0 : index
    %61 = vector.load %arg17[%c1, %c0_33, %c0_34, %c0_35] : memref<2x1x16x16xf32, #tpu.memory_space<vmem>>, vector<1x1x16x16xf32>
    %62 = vector.shape_cast %61 : vector<1x1x16x16xf32> to vector<16x16xf32>
    %63 = vector.shape_cast %60 : vector<16x16xf32> to vector<1x1x16x16xf32>
    tpu.vector_store %arg17[%c1, %c0_33, %c0_34, %c0_35], %63 {strides = array<i32>} : memref<2x1x16x16xf32, #tpu.memory_space<vmem>>, vector<1x1x16x16xf32>,
    %cst_36 = arith.constant dense<0.000000e+00> : vector<16x16xf32>
    %64 = tpu.matmul %60, %43, %cst_36 {dimension_numbers = #tpu.dot_dimension_numbers<[1], [0], [0], [1], [0, 0, 1, 1], [], []>} : vector<16x16xf32>, vector<16x16xf32>, vector<16x16xf32> -> vector<16x16xf32>
    %c16 = arith.constant 16 : index
    %c0_37 = arith.constant 0 : index
    %65 = vector.load %arg6[%c16, %c0_37] : memref<32x32xf32, #tpu.memory_space<vmem>>, vector<16x32xf32>
    %cst_38 = arith.constant dense<0.000000e+00> : vector<16x32xf32>
    %66 = tpu.matmul %64, %65, %cst_38 {dimension_numbers = #tpu.dot_dimension_numbers<[1], [0], [0], [1], [0, 0, 1, 1], [], []>} : vector<16x16xf32>, vector<16x32xf32>, vector<16x32xf32> -> vector<16x32xf32>
    %67 = arith.addf %40, %66 : vector<16x32xf32>
    %c0_39 = arith.constant 0 : index
    %c0_40 = arith.constant 0 : index
    %68 = vector.load %arg7[%c0_39, %c0_40] : memref<1x32xf32, #tpu.memory_space<vmem>>, vector<1x32xf32>
    %69 = vector.shape_cast %68 : vector<1x32xf32> to vector<32xf32>
    %70 = vector.shape_cast %69 : vector<32xf32> to vector<1x32xf32>
    %71 = vector.broadcast %70 : vector<1x32xf32> to vector<16x32xf32>
    %72 = arith.addf %67, %71 : vector<16x32xf32>
    %73 = arith.addf %72, %1 : vector<16x32xf32>
    %c0_41 = arith.constant 0 : index
    %c0_42 = arith.constant 0 : index
    %74 = vector.load %arg8[%c0_41, %c0_42] : memref<1x32xf32, #tpu.memory_space<vmem>>, vector<1x32xf32>
    %75 = vector.shape_cast %74 : vector<1x32xf32> to vector<32xf32>
    %c0_43 = arith.constant 0 : index
    %c0_44 = arith.constant 0 : index
    %76 = vector.load %arg9[%c0_43, %c0_44] : memref<1x32xf32, #tpu.memory_space<vmem>>, vector<1x32xf32>
    %77 = vector.shape_cast %76 : vector<1x32xf32> to vector<32xf32>
    %cst_45 = arith.constant dense<0.000000e+00> : vector<16xf32>
    %78 = vector.multi_reduction <add>, %73, %cst_45 [1] : vector<16x32xf32> to vector<16xf32>
    %79 = vector.shape_cast %78 : vector<16xf32> to vector<16x1xf32>
    %cst_46 = arith.constant 3.200000e+01 : f32
    %80 = vector.broadcast %cst_46 : f32 to vector<16x1xf32>
    %81 = arith.divf %79, %80 : vector<16x1xf32>
    %82 = vector.broadcast %81 : vector<16x1xf32> to vector<16x32xf32>
    %83 = arith.subf %73, %82 : vector<16x32xf32>
    %84 = arith.mulf %83, %83 : vector<16x32xf32>
    %cst_47 = arith.constant dense<0.000000e+00> : vector<16xf32>
    %85 = vector.multi_reduction <add>, %84, %cst_47 [1] : vector<16x32xf32> to vector<16xf32>
    %86 = vector.shape_cast %85 : vector<16xf32> to vector<16x1xf32>
    %cst_48 = arith.constant 3.200000e+01 : f32
    %87 = vector.broadcast %cst_48 : f32 to vector<16x1xf32>
    %88 = arith.divf %86, %87 : vector<16x1xf32>
    %89 = vector.broadcast %81 : vector<16x1xf32> to vector<16x32xf32>
    %90 = arith.subf %73, %89 : vector<16x32xf32>
    %cst_49 = arith.constant 9.99999974E-6 : f32
    %91 = vector.broadcast %cst_49 : f32 to vector<16x1xf32>
    %92 = arith.addf %88, %91 : vector<16x1xf32>
    %93 = math.rsqrt %92 : vector<16x1xf32>
    %94 = vector.broadcast %93 : vector<16x1xf32> to vector<16x32xf32>
    %95 = arith.mulf %90, %94 : vector<16x32xf32>
    %96 = vector.shape_cast %75 : vector<32xf32> to vector<1x32xf32>
    %97 = vector.broadcast %96 : vector<1x32xf32> to vector<16x32xf32>
    %98 = arith.mulf %95, %97 : vector<16x32xf32>
    %99 = vector.shape_cast %77 : vector<32xf32> to vector<1x32xf32>
    %100 = vector.broadcast %99 : vector<1x32xf32> to vector<16x32xf32>
    %101 = arith.addf %98, %100 : vector<16x32xf32>
    %102 = vector.broadcast %5 : vector<16x1xf32> to vector<16x32xf32>
    %103 = arith.mulf %101, %102 : vector<16x32xf32>
    %c0_i32 = arith.constant 0 : i32
    %104 = arith.sitofp %c0_i32 : i32 to f32
    %105 = vector.broadcast %104 : f32 to vector<4x32xf32>
    %106 = tpu.concatenate %105, %103 in 0 : vector<4x32xf32>, vector<16x32xf32> -> vector<20x32xf32>
    %107 = vector.broadcast %104 : f32 to vector<4x32xf32>
    %108 = tpu.concatenate %106, %107 in 0 : vector<20x32xf32>, vector<4x32xf32> -> vector<24x32xf32>
    %109 = vector.extract_strided_slice %108 {offsets = [0, 0], sizes = [16, 32], strides = [1, 1]} : vector<24x32xf32> to vector<16x32xf32>
    %110 = vector.extract_strided_slice %108 {offsets = [1, 0], sizes = [16, 32], strides = [1, 1]} : vector<24x32xf32> to vector<16x32xf32>
    %111 = vector.extract_strided_slice %108 {offsets = [2, 0], sizes = [16, 32], strides = [1, 1]} : vector<24x32xf32> to vector<16x32xf32>
    %112 = vector.extract_strided_slice %108 {offsets = [3, 0], sizes = [16, 32], strides = [1, 1]} : vector<24x32xf32> to vector<16x32xf32>
    %113 = vector.extract_strided_slice %108 {offsets = [4, 0], sizes = [16, 32], strides = [1, 1]} : vector<24x32xf32> to vector<16x32xf32>
    %114 = vector.extract_strided_slice %108 {offsets = [5, 0], sizes = [16, 32], strides = [1, 1]} : vector<24x32xf32> to vector<16x32xf32>
    %115 = vector.extract_strided_slice %108 {offsets = [6, 0], sizes = [16, 32], strides = [1, 1]} : vector<24x32xf32> to vector<16x32xf32>
    %116 = vector.extract_strided_slice %108 {offsets = [7, 0], sizes = [16, 32], strides = [1, 1]} : vector<24x32xf32> to vector<16x32xf32>
    %117 = vector.extract_strided_slice %108 {offsets = [8, 0], sizes = [16, 32], strides = [1, 1]} : vector<24x32xf32> to vector<16x32xf32>
    %118 = tpu.concatenate %109, %110, %111, %112, %113, %114, %115, %116, %117 in 1 : vector<16x32xf32>, vector<16x32xf32>, vector<16x32xf32>, vector<16x32xf32>, vector<16x32xf32>, vector<16x32xf32>, vector<16x32xf32>, vector<16x32xf32>, vector<16x32xf32> -> vector<16x288xf32>
    %c0_50 = arith.constant 0 : index
    %c0_51 = arith.constant 0 : index
    %119 = vector.load %arg10[%c0_50, %c0_51] : memref<288x64xf32, #tpu.memory_space<vmem>>, vector<288x64xf32>
    %cst_52 = arith.constant dense<0.000000e+00> : vector<16x64xf32>
    %120 = tpu.matmul %118, %119, %cst_52 {dimension_numbers = #tpu.dot_dimension_numbers<[1], [0], [0], [1], [0, 0, 1, 1], [], []>} : vector<16x288xf32>, vector<288x64xf32>, vector<16x64xf32> -> vector<16x64xf32>
    %c0_53 = arith.constant 0 : index
    %c0_54 = arith.constant 0 : index
    %121 = vector.load %arg11[%c0_53, %c0_54] : memref<1x64xf32, #tpu.memory_space<vmem>>, vector<1x64xf32>
    %122 = vector.shape_cast %121 : vector<1x64xf32> to vector<64xf32>
    %123 = vector.shape_cast %122 : vector<64xf32> to vector<1x64xf32>
    %124 = vector.broadcast %123 : vector<1x64xf32> to vector<16x64xf32>
    %125 = arith.addf %120, %124 : vector<16x64xf32>
    %cst_55 = arith.constant 0.000000e+00 : f32
    %126 = vector.broadcast %cst_55 : f32 to vector<16x64xf32>
    %127 = arith.maximumf %125, %126 : vector<16x64xf32>
    %c0_56 = arith.constant 0 : index
    %c0_57 = arith.constant 0 : index
    %128 = vector.load %arg12[%c0_56, %c0_57] : memref<64x32xf32, #tpu.memory_space<vmem>>, vector<64x32xf32>
    %cst_58 = arith.constant dense<0.000000e+00> : vector<16x32xf32>
    %129 = tpu.matmul %127, %128, %cst_58 {dimension_numbers = #tpu.dot_dimension_numbers<[1], [0], [0], [1], [0, 0, 1, 1], [], []>} : vector<16x64xf32>, vector<64x32xf32>, vector<16x32xf32> -> vector<16x32xf32>
    %c0_59 = arith.constant 0 : index
    %c0_60 = arith.constant 0 : index
    %130 = vector.load %arg13[%c0_59, %c0_60] : memref<1x32xf32, #tpu.memory_space<vmem>>, vector<1x32xf32>
    %131 = vector.shape_cast %130 : vector<1x32xf32> to vector<32xf32>
    %132 = vector.shape_cast %131 : vector<32xf32> to vector<1x32xf32>
    %133 = vector.broadcast %132 : vector<1x32xf32> to vector<16x32xf32>
    %134 = arith.addf %129, %133 : vector<16x32xf32>
    %135 = arith.addf %134, %103 : vector<16x32xf32>
    %c0_61 = arith.constant 0 : index
    %c0_62 = arith.constant 0 : index
    %136 = vector.load %arg14[%c0_61, %c0_62] : memref<1x32xf32, #tpu.memory_space<vmem>>, vector<1x32xf32>
    %137 = vector.shape_cast %136 : vector<1x32xf32> to vector<32xf32>
    %c0_63 = arith.constant 0 : index
    %c0_64 = arith.constant 0 : index
    %138 = vector.load %arg15[%c0_63, %c0_64] : memref<1x32xf32, #tpu.memory_space<vmem>>, vector<1x32xf32>
    %139 = vector.shape_cast %138 : vector<1x32xf32> to vector<32xf32>
    %cst_65 = arith.constant dense<0.000000e+00> : vector<16xf32>
    %140 = vector.multi_reduction <add>, %135, %cst_65 [1] : vector<16x32xf32> to vector<16xf32>
    %141 = vector.shape_cast %140 : vector<16xf32> to vector<16x1xf32>
    %cst_66 = arith.constant 3.200000e+01 : f32
    %142 = vector.broadcast %cst_66 : f32 to vector<16x1xf32>
    %143 = arith.divf %141, %142 : vector<16x1xf32>
    %144 = vector.broadcast %143 : vector<16x1xf32> to vector<16x32xf32>
    %145 = arith.subf %135, %144 : vector<16x32xf32>
    %146 = arith.mulf %145, %145 : vector<16x32xf32>
    %cst_67 = arith.constant dense<0.000000e+00> : vector<16xf32>
    %147 = vector.multi_reduction <add>, %146, %cst_67 [1] : vector<16x32xf32> to vector<16xf32>
    %148 = vector.shape_cast %147 : vector<16xf32> to vector<16x1xf32>
    %cst_68 = arith.constant 3.200000e+01 : f32
    %149 = vector.broadcast %cst_68 : f32 to vector<16x1xf32>
    %150 = arith.divf %148, %149 : vector<16x1xf32>
    %151 = vector.broadcast %143 : vector<16x1xf32> to vector<16x32xf32>
    %152 = arith.subf %135, %151 : vector<16x32xf32>
    %cst_69 = arith.constant 9.99999974E-6 : f32
    %153 = vector.broadcast %cst_69 : f32 to vector<16x1xf32>
    %154 = arith.addf %150, %153 : vector<16x1xf32>
    %155 = math.rsqrt %154 : vector<16x1xf32>
    %156 = vector.broadcast %155 : vector<16x1xf32> to vector<16x32xf32>
    %157 = arith.mulf %152, %156 : vector<16x32xf32>
    %158 = vector.shape_cast %137 : vector<32xf32> to vector<1x32xf32>
    %159 = vector.broadcast %158 : vector<1x32xf32> to vector<16x32xf32>
    %160 = arith.mulf %157, %159 : vector<16x32xf32>
    %161 = vector.shape_cast %139 : vector<32xf32> to vector<1x32xf32>
    %162 = vector.broadcast %161 : vector<1x32xf32> to vector<16x32xf32>
    %163 = arith.addf %160, %162 : vector<16x32xf32>
    %164 = vector.broadcast %5 : vector<16x1xf32> to vector<16x32xf32>
    %165 = arith.mulf %163, %164 : vector<16x32xf32>
    %c0_70 = arith.constant 0 : index
    %c0_71 = arith.constant 0 : index
    %c0_72 = arith.constant 0 : index
    %166 = vector.load %arg16[%c0_70, %c0_71, %c0_72] : memref<1x16x32xf32, #tpu.memory_space<vmem>>, vector<1x16x32xf32>
    %167 = vector.shape_cast %166 : vector<1x16x32xf32> to vector<16x32xf32>
    %168 = vector.shape_cast %165 : vector<16x32xf32> to vector<1x16x32xf32>
    tpu.vector_store %arg16[%c0_70, %c0_71, %c0_72], %168 {strides = array<i32>} : memref<1x16x32xf32, #tpu.memory_space<vmem>>, vector<1x16x32xf32>,
    return
  }
  func.func @transform_0(%arg0: i32) -> (i32, i32, i32) {
    %c0_i32 = arith.constant 0 : i32
    %c0_i32_0 = arith.constant 0 : i32
    %c0_i32_1 = arith.constant 0 : i32
    return %arg0, %c0_i32, %c0_i32_0 : i32, i32, i32
  }
  func.func @transform_1(%arg0: i32) -> (i32, i32, i32) {
    %c0_i32 = arith.constant 0 : i32
    %c0_i32_0 = arith.constant 0 : i32
    %c0_i32_1 = arith.constant 0 : i32
    return %arg0, %c0_i32, %c0_i32_0 : i32, i32, i32
  }
  func.func @transform_2(%arg0: i32) -> (i32, i32, i32) {
    %c0_i32 = arith.constant 0 : i32
    %c0_i32_0 = arith.constant 0 : i32
    %c0_i32_1 = arith.constant 0 : i32
    return %arg0, %c0_i32, %c0_i32_0 : i32, i32, i32
  }
  func.func @transform_3(%arg0: i32) -> (i32, i32) {
    %c0_i32 = arith.constant 0 : i32
    %c0_i32_0 = arith.constant 0 : i32
    %c0_i32_1 = arith.constant 0 : i32
    return %c0_i32, %c0_i32_0 : i32, i32
  }
  func.func @transform_4(%arg0: i32) -> (i32, i32) {
    %c0_i32 = arith.constant 0 : i32
    %c0_i32_0 = arith.constant 0 : i32
    %c0_i32_1 = arith.constant 0 : i32
    return %c0_i32, %c0_i32_0 : i32, i32
  }
  func.func @transform_5(%arg0: i32) -> (i32, i32) {
    %c0_i32 = arith.constant 0 : i32
    %c0_i32_0 = arith.constant 0 : i32
    %c0_i32_1 = arith.constant 0 : i32
    return %c0_i32, %c0_i32_0 : i32, i32
  }
  func.func @transform_6(%arg0: i32) -> (i32, i32) {
    %c0_i32 = arith.constant 0 : i32
    %c0_i32_0 = arith.constant 0 : i32
    %c0_i32_1 = arith.constant 0 : i32
    return %c0_i32, %c0_i32_0 : i32, i32
  }
  func.func @transform_7(%arg0: i32) -> (i32, i32) {
    %c0_i32 = arith.constant 0 : i32
    %c0_i32_0 = arith.constant 0 : i32
    %c0_i32_1 = arith.constant 0 : i32
    return %c0_i32, %c0_i32_0 : i32, i32
  }
  func.func @transform_8(%arg0: i32) -> (i32, i32) {
    %c0_i32 = arith.constant 0 : i32
    %c0_i32_0 = arith.constant 0 : i32
    %c0_i32_1 = arith.constant 0 : i32
    return %c0_i32, %c0_i32_0 : i32, i32
  }
  func.func @transform_9(%arg0: i32) -> (i32, i32) {
    %c0_i32 = arith.constant 0 : i32
    %c0_i32_0 = arith.constant 0 : i32
    %c0_i32_1 = arith.constant 0 : i32
    return %c0_i32, %c0_i32_0 : i32, i32
  }
  func.func @transform_10(%arg0: i32) -> (i32, i32) {
    %c0_i32 = arith.constant 0 : i32
    %c0_i32_0 = arith.constant 0 : i32
    %c0_i32_1 = arith.constant 0 : i32
    return %c0_i32, %c0_i32_0 : i32, i32
  }
  func.func @transform_11(%arg0: i32) -> (i32, i32) {
    %c0_i32 = arith.constant 0 : i32
    %c0_i32_0 = arith.constant 0 : i32
    %c0_i32_1 = arith.constant 0 : i32
    return %c0_i32, %c0_i32_0 : i32, i32
  }
  func.func @transform_12(%arg0: i32) -> (i32, i32) {
    %c0_i32 = arith.constant 0 : i32
    %c0_i32_0 = arith.constant 0 : i32
    %c0_i32_1 = arith.constant 0 : i32
    return %c0_i32, %c0_i32_0 : i32, i32
  }
  func.func @transform_13(%arg0: i32) -> (i32, i32) {
    %c0_i32 = arith.constant 0 : i32
    %c0_i32_0 = arith.constant 0 : i32
    %c0_i32_1 = arith.constant 0 : i32
    return %c0_i32, %c0_i32_0 : i32, i32
  }
  func.func @transform_14(%arg0: i32) -> (i32, i32) {
    %c0_i32 = arith.constant 0 : i32
    %c0_i32_0 = arith.constant 0 : i32
    %c0_i32_1 = arith.constant 0 : i32
    return %c0_i32, %c0_i32_0 : i32, i32
  }
  func.func @transform_15(%arg0: i32) -> (i32, i32, i32) {
    %c0_i32 = arith.constant 0 : i32
    %c0_i32_0 = arith.constant 0 : i32
    %c0_i32_1 = arith.constant 0 : i32
    return %arg0, %c0_i32, %c0_i32_0 : i32, i32, i32
  }
  func.func @transform_16(%arg0: i32) -> (i32, i32, i32, i32) {
    %c0_i32 = arith.constant 0 : i32
    %c0_i32_0 = arith.constant 0 : i32
    %c0_i32_1 = arith.constant 0 : i32
    %c0_i32_2 = arith.constant 0 : i32
    return %c0_i32, %arg0, %c0_i32_0, %c0_i32_1 : i32, i32, i32, i32
  }
}

</mosaic_0001>

<llo_original>
// kernel: tpu_custom_call.1
$region0: #{tpu_custom_call.1}
  #allocation0 [shape = 'u32[]', space=smem, size = 0x4, offset = 0x4, fixed_abs, tag = 'smem constant byte address 0x4 - core index']
  #allocation1 [shape = 'u32[144,128]{1,0:T(1,128)}', space=vmem, size = 0x12000, scoped, tag = 'internal scratch']
  #allocation6 [shape = 's32[]', space=sflag, size = 0x4, offset = 0, fixed_abs, tag = 'sflag constant byte address 0x0 - dummy sync flag']
  %s0 = inlined_call_operand.vmem [shape: f32[2,16,32], index: 0, kind: input, shape index: {}]
  %s1 = inlined_call_operand.vmem [shape: f32[2,16,16], index: 1, kind: input, shape index: {}]
  %s2 = inlined_call_operand.vmem [shape: f32[2,16,1], index: 2, kind: input, shape index: {}]
  %s3 = inlined_call_operand.vmem [shape: f32[32,96], index: 3, kind: input, shape index: {}]
  %s4 = inlined_call_operand.vmem [shape: f32[1,96], index: 4, kind: input, shape index: {}]
  %s5 = inlined_call_operand.vmem [shape: f32[32,32], index: 5, kind: input, shape index: {}]
  %s6 = inlined_call_operand.vmem [shape: f32[1,32], index: 6, kind: input, shape index: {}]
  %s7 = inlined_call_operand.vmem [shape: f32[1,32], index: 7, kind: input, shape index: {}]
  %s8 = inlined_call_operand.vmem [shape: f32[1,32], index: 8, kind: input, shape index: {}]
  %s9 = inlined_call_operand.vmem [shape: f32[288,64], index: 9, kind: input, shape index: {}]
  %s10 = inlined_call_operand.vmem [shape: f32[1,64], index: 10, kind: input, shape index: {}]
  %s11 = inlined_call_operand.vmem [shape: f32[64,32], index: 11, kind: input, shape index: {}]
  %s12 = inlined_call_operand.vmem [shape: f32[1,32], index: 12, kind: input, shape index: {}]
  %s13 = inlined_call_operand.vmem [shape: f32[1,32], index: 13, kind: input, shape index: {}]
  %s14 = inlined_call_operand.vmem [shape: f32[1,32], index: 14, kind: input, shape index: {}]
  %s15 = inlined_call_operand.hbm [shape: f32[2,16,32], index: 15, kind: output, shape index: {0}]
  %s16 = inlined_call_operand.hbm [shape: f32[2,2,16,16], index: 16, kind: output, shape index: {1}]
  %17 = xla_tuple %s15, %s16
  %s18 = sld [smem:[#allocation0]]
  $region101: #{tpu_custom_call.1} parent=0
    _
  %s20 = ssub.s32 1, %s18
  %s21 = scalar_select 0, %s20, %s18
  $region1: #{tpu_custom_call.1} parent=0
    #allocation2 [shape = 'u8[16384]{0}', space=vmem, size = 0x4000, scoped, tag = 'output window, operand 0']
    #allocation3 [shape = 's32[2]{0}', space=sflag, size = 0x8, scoped, tag = 'scoped memory for tpu_custom_call.1']
    #allocation4 [shape = 'u8[32768]{0}', space=vmem, size = 0x8000, scoped, tag = 'output window, operand 1']
    #allocation5 [shape = 's32[2]{0}', space=sflag, size = 0x8, scoped, tag = 'scoped memory for tpu_custom_call.1']
    %22 = vsyncpa [#allocation3], 0
    %s23 = scalar_lea.sflag [#allocation3], 1
    %24 = vsyncpa %s23, 0
    %25 = vsyncpa [#allocation5], 0
    %s26 = scalar_lea.sflag [#allocation5], 1
    %27 = vsyncpa %s26, 0
    loop: start=0, step=1, limit=4
    $region2: #{tpu_custom_call.1} parent=1 // loop_pre_header
      _
    $region3: #{tpu_custom_call.1} parent=1 // loop_header
      %s29 = sphi 0, %s33
      %p30 = scmp.ge.s32.totalorder %s29, 4
      %s39 = sphi 0, %s41
      %s42 = sphi 0, %s39
      %s43 = sphi 0, %s42
      %s59 = sphi 0, %s43
      %s65 = sphi 0, %s67
      %s68 = sphi 0, %s65
      %s69 = sphi 0, %s68
      %s85 = sphi 0, %s69
      %s91 = sphi 0, %s93
      %s94 = sphi 0, %s91
      %s95 = sphi 0, %s94
      %s111 = sphi 0, %s95
      %s115 = sphi 0, %s115
      %s117 = sphi 0, %s115
      %s118 = sphi 0, %s117
      %s132 = sphi 0, %s118
      %s136 = sphi 0, %s136
      %s138 = sphi 0, %s136
      %s139 = sphi 0, %s138
      %s153 = sphi 0, %s139
      %s157 = sphi 0, %s157
      %s159 = sphi 0, %s157
      %s160 = sphi 0, %s159
      %s174 = sphi 0, %s160
      %s178 = sphi 0, %s178
      %s180 = sphi 0, %s178
      %s181 = sphi 0, %s180
      %s195 = sphi 0, %s181
      %s199 = sphi 0, %s199
      %s201 = sphi 0, %s199
      %s202 = sphi 0, %s201
      %s216 = sphi 0, %s202
      %s220 = sphi 0, %s220
      %s222 = sphi 0, %s220
      %s223 = sphi 0, %s222
      %s237 = sphi 0, %s223
      %s241 = sphi 0, %s241
      %s243 = sphi 0, %s241
      %s244 = sphi 0, %s243
      %s258 = sphi 0, %s244
      %s262 = sphi 0, %s262
      %s264 = sphi 0, %s262
      %s265 = sphi 0, %s264
      %s279 = sphi 0, %s265
      %s283 = sphi 0, %s283
      %s285 = sphi 0, %s283
      %s286 = sphi 0, %s285
      %s300 = sphi 0, %s286
      %s304 = sphi 0, %s304
      %s306 = sphi 0, %s304
      %s307 = sphi 0, %s306
      %s321 = sphi 0, %s307
      %s325 = sphi 0, %s325
      %s327 = sphi 0, %s325
      %s328 = sphi 0, %s327
      %s342 = sphi 0, %s328
      %s346 = sphi 0, %s346
      %s348 = sphi 0, %s346
      %s349 = sphi 0, %s348
      %s363 = sphi 0, %s349
      %s369 = sphi 0, %s371
      %s372 = sphi 0, %s369
      %s373 = sphi 0, %s372
      %s389 = sphi 0, %s373
      %s395 = sphi 0, %s397
      %s398 = sphi 0, %s395
      %s399 = sphi 0, %s398
      %s415 = sphi 0, %s399
    $region4: #{tpu_custom_call.1} parent=1 // loop_header_branch
      %32 = sbr.rel (%p30) target = $region8
    $region5: #{tpu_custom_call.1} parent=1 // loop_body
      %s34 = ssub.s32 %s29, 1
      %s35 = ssub.s32 %s29, 2
      %s36 = sadd.s32 %s29, 1
      %s37 = ssub.s32 %s29, %s36
      %p38 = scmp.eq.s32.totalorder %s37, 0
      %s40 = sadd.s32 %s39, 1
      %s41 = scalar_select %p38, %s39, %s40
      %p44 = pneg %p38
      %p45 = scmp.eq.s32.totalorder %s29, 1
      %p46 = por %p44, %p45
      %p47 = scmp.ne.s32.totalorder %s39, %s42
      %p48 = scmp.eq.s32.totalorder %s29, 0
      %p49 = por %p47, %p48
      %p50 = scmp.ne.s32.totalorder %s39, %s42
      %p51 = scmp.eq.s32.totalorder %s34, 1
      %p52 = por %p50, %p51
      %p53 = scmp.ne.s32.totalorder %s42, %s43
      %p54 = scmp.eq.s32.totalorder %s34, 0
      %p55 = por %p53, %p54
      %p56 = scmp.ne.s32.totalorder %s42, %s43
      %p57 = scmp.eq.s32.totalorder %s35, 1
      %p58 = por %p56, %p57
      %p60 = scmp.ne.s32.totalorder %s43, %s59
      %p61 = scmp.eq.s32.totalorder %s35, 0
      %p62 = por %p60, %p61
      %s63 = ssub.s32 %s29, %s36
      %p64 = scmp.eq.s32.totalorder %s63, 0
      %s66 = sadd.s32 %s65, 1
      %s67 = scalar_select %p64, %s65, %s66
      %p70 = pneg %p64
      %p71 = scmp.eq.s32.totalorder %s29, 1
      %p72 = por %p70, %p71
      %p73 = scmp.ne.s32.totalorder %s65, %s68
      %p74 = scmp.eq.s32.totalorder %s29, 0
      %p75 = por %p73, %p74
      %p76 = scmp.ne.s32.totalorder %s65, %s68
      %p77 = scmp.eq.s32.totalorder %s34, 1
      %p78 = por %p76, %p77
      %p79 = scmp.ne.s32.totalorder %s68, %s69
      %p80 = scmp.eq.s32.totalorder %s34, 0
      %p81 = por %p79, %p80
      %p82 = scmp.ne.s32.totalorder %s68, %s69
      %p83 = scmp.eq.s32.totalorder %s35, 1
      %p84 = por %p82, %p83
      %p86 = scmp.ne.s32.totalorder %s69, %s85
      %p87 = scmp.eq.s32.totalorder %s35, 0
      %p88 = por %p86, %p87
      %s89 = ssub.s32 %s29, %s36
      %p90 = scmp.eq.s32.totalorder %s89, 0
      %s92 = sadd.s32 %s91, 1
      %s93 = scalar_select %p90, %s91, %s92
      %p96 = pneg %p90
      %p97 = scmp.eq.s32.totalorder %s29, 1
      %p98 = por %p96, %p97
      %p99 = scmp.ne.s32.totalorder %s91, %s94
      %p100 = scmp.eq.s32.totalorder %s29, 0
      %p101 = por %p99, %p100
      %p102 = scmp.ne.s32.totalorder %s91, %s94
      %p103 = scmp.eq.s32.totalorder %s34, 1
      %p104 = por %p102, %p103
      %p105 = scmp.ne.s32.totalorder %s94, %s95
      %p106 = scmp.eq.s32.totalorder %s34, 0
      %p107 = por %p105, %p106
      %p108 = scmp.ne.s32.totalorder %s94, %s95
      %p109 = scmp.eq.s32.totalorder %s35, 1
      %p110 = por %p108, %p109
      %p112 = scmp.ne.s32.totalorder %s95, %s111
      %p113 = scmp.eq.s32.totalorder %s35, 0
      %p114 = por %p112, %p113
      %s116 = sadd.s32 %s115, 1
      %p119 = scmp.eq.s32.totalorder %s29, 1
      %p120 = scmp.ne.s32.totalorder %s115, %s117
      %p121 = scmp.eq.s32.totalorder %s29, 0
      %p122 = por %p120, %p121
      %p123 = scmp.ne.s32.totalorder %s115, %s117
      %p124 = scmp.eq.s32.totalorder %s34, 1
      %p125 = por %p123, %p124
      %p126 = scmp.ne.s32.totalorder %s117, %s118
      %p127 = scmp.eq.s32.totalorder %s34, 0
      %p128 = por %p126, %p127
      %p129 = scmp.ne.s32.totalorder %s117, %s118
      %p130 = scmp.eq.s32.totalorder %s35, 1
      %p131 = por %p129, %p130
      %p133 = scmp.ne.s32.totalorder %s118, %s132
      %p134 = scmp.eq.s32.totalorder %s35, 0
      %p135 = por %p133, %p134
      %s137 = sadd.s32 %s136, 1
      %p140 = scmp.eq.s32.totalorder %s29, 1
      %p141 = scmp.ne.s32.totalorder %s136, %s138
      %p142 = scmp.eq.s32.totalorder %s29, 0
      %p143 = por %p141, %p142
      %p144 = scmp.ne.s32.totalorder %s136, %s138
      %p145 = scmp.eq.s32.totalorder %s34, 1
      %p146 = por %p144, %p145
      %p147 = scmp.ne.s32.totalorder %s138, %s139
      %p148 = scmp.eq.s32.totalorder %s34, 0
      %p149 = por %p147, %p148
      %p150 = scmp.ne.s32.totalorder %s138, %s139
      %p151 = scmp.eq.s32.totalorder %s35, 1
      %p152 = por %p150, %p151
      %p154 = scmp.ne.s32.totalorder %s139, %s153
      %p155 = scmp.eq.s32.totalorder %s35, 0
      %p156 = por %p154, %p155
      %s158 = sadd.s32 %s157, 1
      %p161 = scmp.eq.s32.totalorder %s29, 1
      %p162 = scmp.ne.s32.totalorder %s157, %s159
      %p163 = scmp.eq.s32.totalorder %s29, 0
      %p164 = por %p162, %p163
      %p165 = scmp.ne.s32.totalorder %s157, %s159
      %p166 = scmp.eq.s32.totalorder %s34, 1
      %p167 = por %p165, %p166
      %p168 = scmp.ne.s32.totalorder %s159, %s160
      %p169 = scmp.eq.s32.totalorder %s34, 0
      %p170 = por %p168, %p169
      %p171 = scmp.ne.s32.totalorder %s159, %s160
      %p172 = scmp.eq.s32.totalorder %s35, 1
      %p173 = por %p171, %p172
      %p175 = scmp.ne.s32.totalorder %s160, %s174
      %p176 = scmp.eq.s32.totalorder %s35, 0
      %p177 = por %p175, %p176
      %s179 = sadd.s32 %s178, 1
      %p182 = scmp.eq.s32.totalorder %s29, 1
      %p183 = scmp.ne.s32.totalorder %s178, %s180
      %p184 = scmp.eq.s32.totalorder %s29, 0
      %p185 = por %p183, %p184
      %p186 = scmp.ne.s32.totalorder %s178, %s180
      %p187 = scmp.eq.s32.totalorder %s34, 1
      %p188 = por %p186, %p187
      %p189 = scmp.ne.s32.totalorder %s180, %s181
      %p190 = scmp.eq.s32.totalorder %s34, 0
      %p191 = por %p189, %p190
      %p192 = scmp.ne.s32.totalorder %s180, %s181
      %p193 = scmp.eq.s32.totalorder %s35, 1
      %p194 = por %p192, %p193
      %p196 = scmp.ne.s32.totalorder %s181, %s195
      %p197 = scmp.eq.s32.totalorder %s35, 0
      %p198 = por %p196, %p197
      %s200 = sadd.s32 %s199, 1
      %p203 = scmp.eq.s32.totalorder %s29, 1
      %p204 = scmp.ne.s32.totalorder %s199, %s201
      %p205 = scmp.eq.s32.totalorder %s29, 0
      %p206 = por %p204, %p205
      %p207 = scmp.ne.s32.totalorder %s199, %s201
      %p208 = scmp.eq.s32.totalorder %s34, 1
      %p209 = por %p207, %p208
      %p210 = scmp.ne.s32.totalorder %s201, %s202
      %p211 = scmp.eq.s32.totalorder %s34, 0
      %p212 = por %p210, %p211
      %p213 = scmp.ne.s32.totalorder %s201, %s202
      %p214 = scmp.eq.s32.totalorder %s35, 1
      %p215 = por %p213, %p214
      %p217 = scmp.ne.s32.totalorder %s202, %s216
      %p218 = scmp.eq.s32.totalorder %s35, 0
      %p219 = por %p217, %p218
      %s221 = sadd.s32 %s220, 1
      %p224 = scmp.eq.s32.totalorder %s29, 1
      %p225 = scmp.ne.s32.totalorder %s220, %s222
      %p226 = scmp.eq.s32.totalorder %s29, 0
      %p227 = por %p225, %p226
      %p228 = scmp.ne.s32.totalorder %s220, %s222
      %p229 = scmp.eq.s32.totalorder %s34, 1
      %p230 = por %p228, %p229
      %p231 = scmp.ne.s32.totalorder %s222, %s223
      %p232 = scmp.eq.s32.totalorder %s34, 0
      %p233 = por %p231, %p232
      %p234 = scmp.ne.s32.totalorder %s222, %s223
      %p235 = scmp.eq.s32.totalorder %s35, 1
      %p236 = por %p234, %p235
      %p238 = scmp.ne.s32.totalorder %s223, %s237
      %p239 = scmp.eq.s32.totalorder %s35, 0
      %p240 = por %p238, %p239
      %s242 = sadd.s32 %s241, 1
      %p245 = scmp.eq.s32.totalorder %s29, 1
      %p246 = scmp.ne.s32.totalorder %s241, %s243
      %p247 = scmp.eq.s32.totalorder %s29, 0
      %p248 = por %p246, %p247
      %p249 = scmp.ne.s32.totalorder %s241, %s243
      %p250 = scmp.eq.s32.totalorder %s34, 1
      %p251 = por %p249, %p250
      %p252 = scmp.ne.s32.totalorder %s243, %s244
      %p253 = scmp.eq.s32.totalorder %s34, 0
      %p254 = por %p252, %p253
      %p255 = scmp.ne.s32.totalorder %s243, %s244
      %p256 = scmp.eq.s32.totalorder %s35, 1
      %p257 = por %p255, %p256
      %p259 = scmp.ne.s32.totalorder %s244, %s258
      %p260 = scmp.eq.s32.totalorder %s35, 0
      %p261 = por %p259, %p260
      %s263 = sadd.s32 %s262, 1
      %p266 = scmp.eq.s32.totalorder %s29, 1
      %p267 = scmp.ne.s32.totalorder %s262, %s264
      %p268 = scmp.eq.s32.totalorder %s29, 0
      %p269 = por %p267, %p268
      %p270 = scmp.ne.s32.totalorder %s262, %s264
      %p271 = scmp.eq.s32.totalorder %s34, 1
      %p272 = por %p270, %p271
      %p273 = scmp.ne.s32.totalorder %s264, %s265
      %p274 = scmp.eq.s32.totalorder %s34, 0
      %p275 = por %p273, %p274
      %p276 = scmp.ne.s32.totalorder %s264, %s265
      %p277 = scmp.eq.s32.totalorder %s35, 1
      %p278 = por %p276, %p277
      %p280 = scmp.ne.s32.totalorder %s265, %s279
      %p281 = scmp.eq.s32.totalorder %s35, 0
      %p282 = por %p280, %p281
      %s284 = sadd.s32 %s283, 1
      %p287 = scmp.eq.s32.totalorder %s29, 1
      %p288 = scmp.ne.s32.totalorder %s283, %s285
      %p289 = scmp.eq.s32.totalorder %s29, 0
      %p290 = por %p288, %p289
      %p291 = scmp.ne.s32.totalorder %s283, %s285
      %p292 = scmp.eq.s32.totalorder %s34, 1
      %p293 = por %p291, %p292
      %p294 = scmp.ne.s32.totalorder %s285, %s286
      %p295 = scmp.eq.s32.totalorder %s34, 0
      %p296 = por %p294, %p295
      %p297 = scmp.ne.s32.totalorder %s285, %s286
      %p298 = scmp.eq.s32.totalorder %s35, 1
      %p299 = por %p297, %p298
      %p301 = scmp.ne.s32.totalorder %s286, %s300
      %p302 = scmp.eq.s32.totalorder %s35, 0
      %p303 = por %p301, %p302
      %s305 = sadd.s32 %s304, 1
      %p308 = scmp.eq.s32.totalorder %s29, 1
      %p309 = scmp.ne.s32.totalorder %s304, %s306
      %p310 = scmp.eq.s32.totalorder %s29, 0
      %p311 = por %p309, %p310
      %p312 = scmp.ne.s32.totalorder %s304, %s306
      %p313 = scmp.eq.s32.totalorder %s34, 1
      %p314 = por %p312, %p313
      %p315 = scmp.ne.s32.totalorder %s306, %s307
      %p316 = scmp.eq.s32.totalorder %s34, 0
      %p317 = por %p315, %p316
      %p318 = scmp.ne.s32.totalorder %s306, %s307
      %p319 = scmp.eq.s32.totalorder %s35, 1
      %p320 = por %p318, %p319
      %p322 = scmp.ne.s32.totalorder %s307, %s321
      %p323 = scmp.eq.s32.totalorder %s35, 0
      %p324 = por %p322, %p323
      %s326 = sadd.s32 %s325, 1
      %p329 = scmp.eq.s32.totalorder %s29, 1
      %p330 = scmp.ne.s32.totalorder %s325, %s327
      %p331 = scmp.eq.s32.totalorder %s29, 0
      %p332 = por %p330, %p331
      %p333 = scmp.ne.s32.totalorder %s325, %s327
      %p334 = scmp.eq.s32.totalorder %s34, 1
      %p335 = por %p333, %p334
      %p336 = scmp.ne.s32.totalorder %s327, %s328
      %p337 = scmp.eq.s32.totalorder %s34, 0
      %p338 = por %p336, %p337
      %p339 = scmp.ne.s32.totalorder %s327, %s328
      %p340 = scmp.eq.s32.totalorder %s35, 1
      %p341 = por %p339, %p340
      %p343 = scmp.ne.s32.totalorder %s328, %s342
      %p344 = scmp.eq.s32.totalorder %s35, 0
      %p345 = por %p343, %p344
      %s347 = sadd.s32 %s346, 1
      %p350 = scmp.eq.s32.totalorder %s29, 1
      %p351 = scmp.ne.s32.totalorder %s346, %s348
      %p352 = scmp.eq.s32.totalorder %s29, 0
      %p353 = por %p351, %p352
      %p354 = scmp.ne.s32.totalorder %s346, %s348
      %p355 = scmp.eq.s32.totalorder %s34, 1
      %p356 = por %p354, %p355
      %p357 = scmp.ne.s32.totalorder %s348, %s349
      %p358 = scmp.eq.s32.totalorder %s34, 0
      %p359 = por %p357, %p358
      %p360 = scmp.ne.s32.totalorder %s348, %s349
      %p361 = scmp.eq.s32.totalorder %s35, 1
      %p362 = por %p360, %p361
      %p364 = scmp.ne.s32.totalorder %s349, %s363
      %p365 = scmp.eq.s32.totalorder %s35, 0
      %p366 = por %p364, %p365
      %s367 = ssub.s32 %s29, %s36
      %p368 = scmp.eq.s32.totalorder %s367, 0
      %s370 = sadd.s32 %s369, 1
      %s371 = scalar_select %p368, %s369, %s370
      %p374 = pneg %p368
      %p375 = scmp.eq.s32.totalorder %s29, 1
      %p376 = por %p374, %p375
      %p377 = scmp.ne.s32.totalorder %s369, %s372
      %p378 = scmp.eq.s32.totalorder %s29, 0
      %p379 = por %p377, %p378
      %p380 = scmp.ne.s32.totalorder %s369, %s372
      %p381 = scmp.eq.s32.totalorder %s34, 1
      %p382 = por %p380, %p381
      %p383 = scmp.ne.s32.totalorder %s372, %s373
      %p384 = scmp.eq.s32.totalorder %s34, 0
      %p385 = por %p383, %p384
      %p386 = scmp.ne.s32.totalorder %s372, %s373
      %p387 = scmp.eq.s32.totalorder %s35, 1
      %p388 = por %p386, %p387
      %p390 = scmp.ne.s32.totalorder %s373, %s389
      %p391 = scmp.eq.s32.totalorder %s35, 0
      %p392 = por %p390, %p391
      %s393 = ssub.s32 %s29, %s36
      %p394 = scmp.eq.s32.totalorder %s393, 0
      %s396 = sadd.s32 %s395, 1
      %s397 = scalar_select %p394, %s395, %s396
      %p400 = pneg %p394
      %p401 = scmp.eq.s32.totalorder %s29, 1
      %p402 = por %p400, %p401
      %p403 = scmp.ne.s32.totalorder %s395, %s398
      %p404 = scmp.eq.s32.totalorder %s29, 0
      %p405 = por %p403, %p404
      %p406 = scmp.ne.s32.totalorder %s395, %s398
      %p407 = scmp.eq.s32.totalorder %s34, 1
      %p408 = por %p406, %p407
      %p409 = scmp.ne.s32.totalorder %s398, %s399
      %p410 = scmp.eq.s32.totalorder %s34, 0
      %p411 = por %p409, %p410
      %p412 = scmp.ne.s32.totalorder %s398, %s399
      %p413 = scmp.eq.s32.totalorder %s35, 1
      %p414 = por %p412, %p413
      %p416 = scmp.ne.s32.totalorder %s399, %s415
      %p417 = scmp.eq.s32.totalorder %s35, 0
      %p418 = por %p416, %p417
      %p419 = scmp.le.s32.totalorder 1, %s29
      %p420 = scmp.lt.s32.totalorder %s29, 3
      %p421 = pnand %p419, %p420
      %p422 = pneg %p421
      // Predicated region
      $region9: #{tpu_custom_call.1} parent=5 // pred_check
        _
      $region10: #{tpu_custom_call.1} parent=5 // pred_check_branch
        %424 = sbr.rel (%p421) target = $region12
      $region11: #{tpu_custom_call.1} parent=5 // pred_region
        %s425 = ssub.s32 %s29, 1
        // Predicated region
        $region13: #{tpu_custom_call.1} parent=11 // pred_check
          %p426 = pneg %p128
        $region14: #{tpu_custom_call.1} parent=11 // pred_check_branch
          %428 = sbr.rel (%p426) target = $region16
        $region15: #{tpu_custom_call.1} parent=11 // pred_region
          _
        $region16: #{tpu_custom_call.1} parent=11 // pred_fallthru
          _
        // Predicated region
        $region17: #{tpu_custom_call.1} parent=11 // pred_check
          %p429 = pneg %p149
        $region18: #{tpu_custom_call.1} parent=11 // pred_check_branch
          %431 = sbr.rel (%p429) target = $region20
        $region19: #{tpu_custom_call.1} parent=11 // pred_region
          _
        $region20: #{tpu_custom_call.1} parent=11 // pred_fallthru
          _
        // Predicated region
        $region21: #{tpu_custom_call.1} parent=11 // pred_check
          %p432 = pneg %p170
        $region22: #{tpu_custom_call.1} parent=11 // pred_check_branch
          %434 = sbr.rel (%p432) target = $region24
        $region23: #{tpu_custom_call.1} parent=11 // pred_region
          _
        $region24: #{tpu_custom_call.1} parent=11 // pred_fallthru
          _
        // Predicated region
        $region25: #{tpu_custom_call.1} parent=11 // pred_check
          %p435 = pneg %p191
        $region26: #{tpu_custom_call.1} parent=11 // pred_check_branch
          %437 = sbr.rel (%p435) target = $region28
        $region27: #{tpu_custom_call.1} parent=11 // pred_region
          _
        $region28: #{tpu_custom_call.1} parent=11 // pred_fallthru
          _
        // Predicated region
        $region29: #{tpu_custom_call.1} parent=11 // pred_check
          %p438 = pneg %p212
        $region30: #{tpu_custom_call.1} parent=11 // pred_check_branch
          %440 = sbr.rel (%p438) target = $region32
        $region31: #{tpu_custom_call.1} parent=11 // pred_region
          _
        $region32: #{tpu_custom_call.1} parent=11 // pred_fallthru
          _
        // Predicated region
        $region33: #{tpu_custom_call.1} parent=11 // pred_check
          %p441 = pneg %p233
        $region34: #{tpu_custom_call.1} parent=11 // pred_check_branch
          %443 = sbr.rel (%p441) target = $region36
        $region35: #{tpu_custom_call.1} parent=11 // pred_region
          _
        $region36: #{tpu_custom_call.1} parent=11 // pred_fallthru
          _
        // Predicated region
        $region37: #{tpu_custom_call.1} parent=11 // pred_check
          %p444 = pneg %p254
        $region38: #{tpu_custom_call.1} parent=11 // pred_check_branch
          %446 = sbr.rel (%p444) target = $region40
        $region39: #{tpu_custom_call.1} parent=11 // pred_region
          _
        $region40: #{tpu_custom_call.1} parent=11 // pred_fallthru
          _
        // Predicated region
        $region41: #{tpu_custom_call.1} parent=11 // pred_check
          %p447 = pneg %p275
        $region42: #{tpu_custom_call.1} parent=11 // pred_check_branch
          %449 = sbr.rel (%p447) target = $region44
        $region43: #{tpu_custom_call.1} parent=11 // pred_region
          _
        $region44: #{tpu_custom_call.1} parent=11 // pred_fallthru
          _
        // Predicated region
        $region45: #{tpu_custom_call.1} parent=11 // pred_check
          %p450 = pneg %p296
        $region46: #{tpu_custom_call.1} parent=11 // pred_check_branch
          %452 = sbr.rel (%p450) target = $region48
        $region47: #{tpu_custom_call.1} parent=11 // pred_region
          _
        $region48: #{tpu_custom_call.1} parent=11 // pred_fallthru
          _
        // Predicated region
        $region49: #{tpu_custom_call.1} parent=11 // pred_check
          %p453 = pneg %p317
        $region50: #{tpu_custom_call.1} parent=11 // pred_check_branch
          %455 = sbr.rel (%p453) target = $region52
        $region51: #{tpu_custom_call.1} parent=11 // pred_region
          _
        $region52: #{tpu_custom_call.1} parent=11 // pred_fallthru
          _
        // Predicated region
        $region53: #{tpu_custom_call.1} parent=11 // pred_check
          %p456 = pneg %p338
        $region54: #{tpu_custom_call.1} parent=11 // pred_check_branch
          %458 = sbr.rel (%p456) target = $region56
        $region55: #{tpu_custom_call.1} parent=11 // pred_region
          _
        $region56: #{tpu_custom_call.1} parent=11 // pred_fallthru
          _
        // Predicated region
        $region57: #{tpu_custom_call.1} parent=11 // pred_check
          %p459 = pneg %p359
        $region58: #{tpu_custom_call.1} parent=11 // pred_check_branch
          %461 = sbr.rel (%p459) target = $region60
        $region59: #{tpu_custom_call.1} parent=11 // pred_region
          _
        $region60: #{tpu_custom_call.1} parent=11 // pred_fallthru
          _
      $region12: #{tpu_custom_call.1} parent=5 // pred_fallthru
        _
      %p462 = scmp.lt.s32.totalorder %s29, 2
      // Predicated region
      $region61: #{tpu_custom_call.1} parent=5 // pred_check
        %p463 = pneg %p462
      $region62: #{tpu_custom_call.1} parent=5 // pred_check_branch
        %465 = sbr.rel (%p463) target = $region64
      $region63: #{tpu_custom_call.1} parent=5 // pred_region
        // Predicated region
        $region65: #{tpu_custom_call.1} parent=63 // pred_check
          %p466 = pneg %p49
        $region66: #{tpu_custom_call.1} parent=63 // pred_check_branch
          %468 = sbr.rel (%p466) target = $region68
        $region67: #{tpu_custom_call.1} parent=63 // pred_region
          %p469 = scmp.lt.s32.totalorder %s29, 1
          %s470 = scalar_select %p469, %s29, 1
          %s471 = smul.addr %s470, 2
          %s472 = smul.addr %s471, 8
          %s473 = scalar_lea.vmem %s0, %s472
        $region68: #{tpu_custom_call.1} parent=63 // pred_fallthru
          _
        // Predicated region
        $region69: #{tpu_custom_call.1} parent=63 // pred_check
          %p474 = pneg %p75
        $region70: #{tpu_custom_call.1} parent=63 // pred_check_branch
          %476 = sbr.rel (%p474) target = $region72
        $region71: #{tpu_custom_call.1} parent=63 // pred_region
          %p477 = scmp.lt.s32.totalorder %s29, 1
          %s478 = scalar_select %p477, %s29, 1
          %s479 = smul.addr %s478, 2
          %s480 = smul.addr %s479, 8
          %s481 = scalar_lea.vmem %s1, %s480
        $region72: #{tpu_custom_call.1} parent=63 // pred_fallthru
          _
        // Predicated region
        $region73: #{tpu_custom_call.1} parent=63 // pred_check
          %p482 = pneg %p101
        $region74: #{tpu_custom_call.1} parent=63 // pred_check_branch
          %484 = sbr.rel (%p482) target = $region76
        $region75: #{tpu_custom_call.1} parent=63 // pred_region
          %p485 = scmp.lt.s32.totalorder %s29, 1
          %s486 = scalar_select %p485, %s29, 1
          %s487 = smul.addr %s486, 2
          %s488 = smul.addr %s487, 8
          %s489 = scalar_lea.vmem %s2, %s488
        $region76: #{tpu_custom_call.1} parent=63 // pred_fallthru
          _
      $region64: #{tpu_custom_call.1} parent=5 // pred_fallthru
        _
      %p490 = scmp.le.s32.totalorder 1, %s29
      %p491 = scmp.lt.s32.totalorder %s29, 3
      %p492 = pnand %p490, %p491
      %p493 = pneg %p492
      // Predicated region
      $region77: #{tpu_custom_call.1} parent=5 // pred_check
        _
      $region78: #{tpu_custom_call.1} parent=5 // pred_check_branch
        %495 = sbr.rel (%p492) target = $region80
      $region79: #{tpu_custom_call.1} parent=5 // pred_region
        %s496 = ssub.s32 %s29, 1
        %p497 = scmp.lt.s32.totalorder %s34, 1
        %s498 = scalar_select %p497, %s34, 1
        %s499 = smul.addr %s498, 2
        %s500 = smul.addr %s499, 8
        %s501 = scalar_lea.vmem %s0, %s500
        %p502 = pneg %p55
        %p503 = pneg %p52
        %p504 = scmp.lt.s32.totalorder %s34, 1
        %s505 = scalar_select %p504, %s34, 1
        %s506 = smul.addr %s505, 2
        %s507 = smul.addr %s506, 8
        %s508 = scalar_lea.vmem %s1, %s507
        %p509 = pneg %p81
        %p510 = pneg %p78
        %p511 = scmp.lt.s32.totalorder %s34, 1
        %s512 = scalar_select %p511, %s34, 1
        %s513 = smul.addr %s512, 2
        %s514 = smul.addr %s513, 8
        %s515 = scalar_lea.vmem %s2, %s514
        %p516 = pneg %p107
        %p517 = pneg %p104
        %p518 = pneg %p128
        %p519 = pneg %p125
        %p520 = pneg %p149
        %p521 = pneg %p146
        %p522 = pneg %p170
        %p523 = pneg %p167
        %p524 = pneg %p191
        %p525 = pneg %p188
        %p526 = pneg %p212
        %p527 = pneg %p209
        %p528 = pneg %p233
        %p529 = pneg %p230
        %p530 = pneg %p254
        %p531 = pneg %p251
        %p532 = pneg %p275
        %p533 = pneg %p272
        %p534 = pneg %p296
        %p535 = pneg %p293
        %p536 = pneg %p317
        %p537 = pneg %p314
        %p538 = pneg %p338
        %p539 = pneg %p335
        %p540 = pneg %p359
        %p541 = pneg %p356
        %p542 = pneg %p385
        %p543 = pneg %p382
        %s544 = sand.u32 %s372, 1
        %s545 = scalar_lea.sflag [#allocation3], %s544
        %s546 = sand.u32 %s372, 1
        %s547 = smul.addr %s546, 16
        %s548 = scalar_lea.vmem [#allocation2], %s547
        %p549 = pneg %p411
        %p550 = pneg %p408
        %s551 = sand.u32 %s398, 1
        %s552 = scalar_lea.sflag [#allocation5], %s551
        %s553 = sand.u32 %s398, 1
        %s554 = smul.addr %s553, 32
        %s555 = scalar_lea.vmem [#allocation4], %s554
        %p556 = scmp.lt.s32.totalorder %s34, 1
        %s557 = scalar_select %p556, %s34, 1
        %s558 = smul.addr %s557, 2
        %s559 = smul.addr %s558, 8
        %s560 = scalar_lea.vmem %s0, %s559
        %p561 = scmp.lt.s32.totalorder %s34, 1
        %s562 = scalar_select %p561, %s34, 1
        %s563 = smul.addr %s562, 2
        %s564 = smul.addr %s563, 8
        %s565 = scalar_lea.vmem %s1, %s564
        %p566 = scmp.lt.s32.totalorder %s34, 1
        %s567 = scalar_select %p566, %s34, 1
        %s568 = smul.addr %s567, 2
        %s569 = smul.addr %s568, 8
        %s570 = scalar_lea.vmem %s2, %s569
        %v571 = vld [vmem:[%s560] sm:$0xff]
        %v572 = vld [vmem:[%s560 + $0x8] sm:$0xff]
        %v573 = vld [vmem:[%s565] sm:$0xff]
        %v574 = vld [vmem:[%s565 + $0x8] sm:$0xff]
        %v575 = vld [vmem:[%s570] sm:$0xff]
        %v576 = vld [vmem:[%s570 + $0x8] sm:$0xff]
        %v577 = vld [vmem:[%s3] sm:$0xff]
        %v578 = vld [vmem:[%s3 + $0x8] sm:$0xff]
        %v579 = vld [vmem:[%s3 + $0x10] sm:$0xff]
        %v580 = vld [vmem:[%s3 + $0x18] sm:$0xff]
        %v581 = vld [vmem:[%s4] sm:$0x1]
        %v583 = vlaneseq
        %v584 = vshrl.u32 %v583, 7
        %v585 = vsub.s32 0, %v584
        %v586 = vrot.slane %v581, %v585
        %vm588 = vcmask 261120
        %v590 = vsel %vm588, %v571, 0
        %v593 = vsel %vm588, %v572, 0
        %595 = vmatprep.subr.mxu0 0.0
        %596 = vmatpush1.msra.mxu0 %v577
        %597 = vmatprep.subr.mxu0 0.0
        %598 = vmatpush1.msra.mxu0 %v578
        %599 = vmatprep.subr.mxu0 0.0
        %600 = vmatpush1.msra.mxu0 %v579
        %601 = vmatprep.subr.mxu0 0.0
        %602 = vmatpush1.msra.mxu0 %v580
        %603 = vmatprep.subr.mxu0 0.0
        %604 = vmatpush1.msra.mxu0 0.0
        %605 = vmatprep.subr.mxu0 0.0
        %606 = vmatpush1.msra.mxu0 0.0
        %607 = vmatprep.subr.mxu0 0.0
        %608 = vmatpush1.msra.mxu0 0.0
        %609 = vmatprep.subr.mxu0 0.0
        %610 = vmatpush1.msra.mxu0 0.0
        %611 = vmatprep.subr.mxu0 0.0
        %612 = vmatpush1.msra.mxu0 0.0
        %613 = vmatprep.subr.mxu0 0.0
        %614 = vmatpush1.msra.mxu0 0.0
        %615 = vmatprep.subr.mxu0 0.0
        %616 = vmatpush1.msra.mxu0 0.0
        %617 = vmatprep.subr.mxu0 0.0
        %618 = vmatpush1.msra.mxu0 0.0
        %619 = vmatprep.subr.mxu0 0.0
        %620 = vmatpush1.msra.mxu0 0.0
        %621 = vmatprep.subr.mxu0 0.0
        %622 = vmatpush1.msra.mxu0 0.0
        %623 = vmatprep.subr.mxu0 0.0
        %624 = vmatpush1.msra.mxu0 0.0
        %625 = vmatprep.subr.mxu0 0.0
        %626 = vmatpush1.msra.mxu0 0.0
        %627 = vmatprep.subr.mxu0 0.0
        %628 = vmatpush1.msra.mxu0 0.0
        %629 = vmatprep.subr.mxu0 0.0
        %630 = vmatpush1.msra.mxu0 0.0
        %631 = vmatprep.subr.mxu0 0.0
        %632 = vmatpush1.msra.mxu0 0.0
        %633 = vmatprep.subr.mxu0 0.0
        %634 = vmatpush1.msra.mxu0 0.0
        %635 = vmatprep.subr.mxu0 0.0
        %636 = vmatpush1.msra.mxu0 0.0
        %637 = vmatprep.subr.mxu0 0.0
        %638 = vmatpush1.msra.mxu0 0.0
        %639 = vmatprep.subr.mxu0 0.0
        %640 = vmatpush1.msra.mxu0 0.0
        %641 = vmatprep.subr.mxu0 0.0
        %642 = vmatpush1.msra.mxu0 0.0
        %643 = vmatprep.subr.mxu0 0.0
        %644 = vmatpush1.msra.mxu0 0.0
        %645 = vmatprep.subr.mxu0 0.0
        %646 = vmatpush1.msra.mxu0 0.0
        %647 = vmatprep.subr.mxu0 0.0
        %648 = vmatpush1.msra.mxu0 0.0
        %649 = vmatprep.subr.mxu0 0.0
        %650 = vmatpush1.msra.mxu0 0.0
        %651 = vmatprep.subr.mxu0 0.0
        %652 = vmatpush1.msra.mxu0 0.0
        %653 = vmatprep.subr.mxu0 0.0
        %654 = vmatpush1.msra.mxu0 0.0
        %655 = vmatprep.subr.mxu0 0.0
        %656 = vmatpush1.msra.mxu0 0.0
        %657 = vmatprep.subr.mxu0 0.0
        %658 = vmatpush1.msra.mxu0 0.0
        %659 = vmatprep.mubr.f32.mxu0 0.0
        %660 = vmatmul.mubr.f32.gmra.mrb[0].mxu0 %v590
        %v661 = vpop.f32.mrb[0].mxu0
        %v662 = vadd.f32 %v586, %v661
        %v663 = vpop.f32.mrb[0].mxu0
        %664 = vmatprep.mubr.f32.mxu0 0.0
        %665 = vmatmul.mubr.f32.gmra.mrb[0].mxu0 %v593
        %v666 = vpop.f32.mrb[0].mxu0
        %v667 = vadd.f32 %v586, %v666
        %v668 = vpop.f32.mrb[0].mxu0
        %669 = vdwg.mxu0
        %672 = vrot.lane.b32.xlu0 %v662, 96
        %v673 = vpop.permute.xlu0 %672
        %674 = vrot.lane.b32.xlu0 %v667, 96
        %v675 = vpop.permute.xlu0 %674
        %vm676 = vcmask 130048
        %v677 = vsel %vm676, %v662, 0
        %v679 = vsel %vm676, %v667, 0
        %v681 = vsel %vm676, %v673, 0
        %v683 = vsel %vm676, %v675, 0
        %685 = vmatprep.subr.mxu0 0.0
        %686 = vmatpush1.xpose.msra.mxu0 %v681
        %687 = vmatprep.subr.mxu0 0.0
        %688 = vmatpush1.xpose.msra.mxu0 %v683
        %689 = vmatprep.subr.mxu0 0.0
        %690 = vmatpush1.xpose.msra.mxu0 0.0
        %691 = vmatprep.subr.mxu0 0.0
        %692 = vmatpush1.xpose.msra.mxu0 0.0
        %693 = vmatprep.subr.mxu0 0.0
        %694 = vmatpush1.xpose.msra.mxu0 0.0
        %695 = vmatprep.subr.mxu0 0.0
        %696 = vmatpush1.xpose.msra.mxu0 0.0
        %697 = vmatprep.subr.mxu0 0.0
        %698 = vmatpush1.xpose.msra.mxu0 0.0
        %699 = vmatprep.subr.mxu0 0.0
        %700 = vmatpush1.xpose.msra.mxu0 0.0
        %701 = vmatprep.subr.mxu0 0.0
        %702 = vmatpush1.xpose.msra.mxu0 0.0
        %703 = vmatprep.subr.mxu0 0.0
        %704 = vmatpush1.xpose.msra.mxu0 0.0
        %705 = vmatprep.subr.mxu0 0.0
        %706 = vmatpush1.xpose.msra.mxu0 0.0
        %707 = vmatprep.subr.mxu0 0.0
        %708 = vmatpush1.xpose.msra.mxu0 0.0
        %709 = vmatprep.subr.mxu0 0.0
        %710 = vmatpush1.xpose.msra.mxu0 0.0
        %711 = vmatprep.subr.mxu0 0.0
        %712 = vmatpush1.xpose.msra.mxu0 0.0
        %713 = vmatprep.subr.mxu0 0.0
        %714 = vmatpush1.xpose.msra.mxu0 0.0
        %715 = vmatprep.subr.mxu0 0.0
        %716 = vmatpush1.xpose.msra.mxu0 0.0
        %717 = vmatprep.subr.mxu0 0.0
        %718 = vmatpush1.xpose.msra.mxu0 0.0
        %719 = vmatprep.subr.mxu0 0.0
        %720 = vmatpush1.xpose.msra.mxu0 0.0
        %721 = vmatprep.subr.mxu0 0.0
        %722 = vmatpush1.xpose.msra.mxu0 0.0
        %723 = vmatprep.subr.mxu0 0.0
        %724 = vmatpush1.xpose.msra.mxu0 0.0
        %725 = vmatprep.subr.mxu0 0.0
        %726 = vmatpush1.xpose.msra.mxu0 0.0
        %727 = vmatprep.subr.mxu0 0.0
        %728 = vmatpush1.xpose.msra.mxu0 0.0
        %729 = vmatprep.subr.mxu0 0.0
        %730 = vmatpush1.xpose.msra.mxu0 0.0
        %731 = vmatprep.subr.mxu0 0.0
        %732 = vmatpush1.xpose.msra.mxu0 0.0
        %733 = vmatprep.subr.mxu0 0.0
        %734 = vmatpush1.xpose.msra.mxu0 0.0
        %735 = vmatprep.subr.mxu0 0.0
        %736 = vmatpush1.xpose.msra.mxu0 0.0
        %737 = vmatprep.subr.mxu0 0.0
        %738 = vmatpush1.xpose.msra.mxu0 0.0
        %739 = vmatprep.subr.mxu0 0.0
        %740 = vmatpush1.xpose.msra.mxu0 0.0
        %741 = vmatprep.subr.mxu0 0.0
        %742 = vmatpush1.xpose.msra.mxu0 0.0
        %743 = vmatprep.subr.mxu0 0.0
        %744 = vmatpush1.xpose.msra.mxu0 0.0
        %745 = vmatprep.subr.mxu0 0.0
        %746 = vmatpush1.xpose.msra.mxu0 0.0
        %747 = vmatprep.subr.mxu0 0.0
        %748 = vmatpush1.xpose.msra.mxu0 0.0
        %749 = vmatprep.mubr.f32.mxu0 0.0
        %750 = vmatmul.mubr.f32.gmra.mrb[0].mxu0 %v677
        %v751 = vpop.f32.mrb[0].mxu0
        %v752 = vadd.f32 0.0, %v751
        %v753 = vpop.f32.mrb[0].mxu0
        %754 = vmatprep.mubr.f32.mxu0 0.0
        %755 = vmatmul.mubr.f32.gmra.mrb[0].mxu0 %v679
        %v756 = vpop.f32.mrb[0].mxu0
        %v757 = vadd.f32 0.0, %v756
        %v758 = vpop.f32.mrb[0].mxu0
        %759 = vdwg.mxu0
        %v760 = vmul.f32 %v752, 0.25
        %v761 = vmul.f32 %v757, 0.25
        %vm762 = vcmp.gt.f32.partialorder %v573, 0.0
        %vm763 = vcmp.gt.f32.partialorder %v574, 0.0
        %v764 = vsel %vm762, -1e+30, %v760
        %v765 = vsel %vm763, -1e+30, %v761
        %v766 = vsel %vm676, %v764, -inf
        %767 = vmax.xlane.f32.xlu0 %v766
        %v768 = vpop.xlane.xlu0 %767
        %v769 = vsel %vm676, %v765, -inf
        %770 = vmax.xlane.f32.xlu0 %v769
        %v771 = vpop.xlane.xlu0 %770
        %v772 = vsub.f32 %v764, %v768
        %v773 = vsub.f32 %v765, %v771
        %v774 = vmul.f32 %v772, 1.442695
        %v775 = vpow.pop %v774
        %v776 = vmul.f32 %v773, 1.442695
        %v777 = vpow.pop %v776
        %v778 = vsel %vm676, %v775, 0.0
        %779 = vadd.xlane.f32.xlu0 %v778
        %v780 = vpop.xlane.xlu0 %779
        %v781 = vsel %vm676, %v777, 0.0
        %782 = vadd.xlane.f32.xlu0 %v781
        %v783 = vpop.xlane.xlu0 %782
        %v784 = vrcp.pop %v780
        %v785 = vmul.f32 %v775, %v784
        %v786 = vrcp.pop %v783
        %v787 = vmul.f32 %v777, %v786
        %788 = vst.msk [vmem:[%s555] sm:$0xff] %vm676, %v785
        %789 = vst.msk [vmem:[%s555 + $0x8] sm:$0xff] %vm676, %v787
        %790 = vrot.lane.b32.xlu0 %v662, 64
        %v791 = vpop.permute.xlu0 %790
        %792 = vrot.lane.b32.xlu0 %v667, 64
        %v793 = vpop.permute.xlu0 %792
        %v797 = vsel %vm676, %v785, 0
        %v800 = vsel %vm676, %v787, 0
        %802 = vmatprep.subr.mxu0 0.0
        %803 = vmatpush1.msra.mxu0 %v791
        %804 = vmatprep.subr.mxu0 0.0
        %805 = vmatpush1.msra.mxu0 %v793
        %806 = vmatprep.subr.mxu0 0.0
        %807 = vmatpush1.msra.mxu0 0.0
        %808 = vmatprep.subr.mxu0 0.0
        %809 = vmatpush1.msra.mxu0 0.0
        %810 = vmatprep.subr.mxu0 0.0
        %811 = vmatpush1.msra.mxu0 0.0
        %812 = vmatprep.subr.mxu0 0.0
        %813 = vmatpush1.msra.mxu0 0.0
        %814 = vmatprep.subr.mxu0 0.0
        %815 = vmatpush1.msra.mxu0 0.0
        %816 = vmatprep.subr.mxu0 0.0
        %817 = vmatpush1.msra.mxu0 0.0
        %818 = vmatprep.subr.mxu0 0.0
        %819 = vmatpush1.msra.mxu0 0.0
        %820 = vmatprep.subr.mxu0 0.0
        %821 = vmatpush1.msra.mxu0 0.0
        %822 = vmatprep.subr.mxu0 0.0
        %823 = vmatpush1.msra.mxu0 0.0
        %824 = vmatprep.subr.mxu0 0.0
        %825 = vmatpush1.msra.mxu0 0.0
        %826 = vmatprep.subr.mxu0 0.0
        %827 = vmatpush1.msra.mxu0 0.0
        %828 = vmatprep.subr.mxu0 0.0
        %829 = vmatpush1.msra.mxu0 0.0
        %830 = vmatprep.subr.mxu0 0.0
        %831 = vmatpush1.msra.mxu0 0.0
        %832 = vmatprep.subr.mxu0 0.0
        %833 = vmatpush1.msra.mxu0 0.0
        %834 = vmatprep.subr.mxu0 0.0
        %835 = vmatpush1.msra.mxu0 0.0
        %836 = vmatprep.subr.mxu0 0.0
        %837 = vmatpush1.msra.mxu0 0.0
        %838 = vmatprep.subr.mxu0 0.0
        %839 = vmatpush1.msra.mxu0 0.0
        %840 = vmatprep.subr.mxu0 0.0
        %841 = vmatpush1.msra.mxu0 0.0
        %842 = vmatprep.subr.mxu0 0.0
        %843 = vmatpush1.msra.mxu0 0.0
        %844 = vmatprep.subr.mxu0 0.0
        %845 = vmatpush1.msra.mxu0 0.0
        %846 = vmatprep.subr.mxu0 0.0
        %847 = vmatpush1.msra.mxu0 0.0
        %848 = vmatprep.subr.mxu0 0.0
        %849 = vmatpush1.msra.mxu0 0.0
        %850 = vmatprep.subr.mxu0 0.0
        %851 = vmatpush1.msra.mxu0 0.0
        %852 = vmatprep.subr.mxu0 0.0
        %853 = vmatpush1.msra.mxu0 0.0
        %854 = vmatprep.subr.mxu0 0.0
        %855 = vmatpush1.msra.mxu0 0.0
        %856 = vmatprep.subr.mxu0 0.0
        %857 = vmatpush1.msra.mxu0 0.0
        %858 = vmatprep.subr.mxu0 0.0
        %859 = vmatpush1.msra.mxu0 0.0
        %860 = vmatprep.subr.mxu0 0.0
        %861 = vmatpush1.msra.mxu0 0.0
        %862 = vmatprep.subr.mxu0 0.0
        %863 = vmatpush1.msra.mxu0 0.0
        %864 = vmatprep.subr.mxu0 0.0
        %865 = vmatpush1.msra.mxu0 0.0
        %866 = vmatprep.mubr.f32.mxu0 0.0
        %867 = vmatmul.mubr.f32.gmra.mrb[0].mxu0 %v797
        %v868 = vpop.f32.mrb[0].mxu0
        %v869 = vadd.f32 0.0, %v868
        %v870 = vpop.f32.mrb[0].mxu0
        %871 = vmatprep.mubr.f32.mxu0 0.0
        %872 = vmatmul.mubr.f32.gmra.mrb[0].mxu0 %v800
        %v873 = vpop.f32.mrb[0].mxu0
        %v874 = vadd.f32 0.0, %v873
        %v875 = vpop.f32.mrb[0].mxu0
        %876 = vdwg.mxu0
        %v877 = vld [vmem:[%s5] sm:$0xff]
        %v878 = vld [vmem:[%s5 + $0x8] sm:$0xff]
        %879 = vrot.lane.b32.xlu0 %v662, 112
        %v880 = vpop.permute.xlu0 %879
        %881 = vrot.lane.b32.xlu0 %v667, 112
        %v882 = vpop.permute.xlu0 %881
        %883 = vrot.lane.b32.xlu0 %v662, 80
        %v884 = vpop.permute.xlu0 %883
        %885 = vrot.lane.b32.xlu0 %v667, 80
        %v886 = vpop.permute.xlu0 %885
        %v887 = vsel %vm676, %v880, 0
        %v889 = vsel %vm676, %v882, 0
        %v891 = vsel %vm676, %v884, 0
        %v893 = vsel %vm676, %v886, 0
        %895 = vmatprep.subr.mxu0 0.0
        %896 = vmatpush1.xpose.msra.mxu0 %v891
        %897 = vmatprep.subr.mxu0 0.0
        %898 = vmatpush1.xpose.msra.mxu0 %v893
        %899 = vmatprep.subr.mxu0 0.0
        %900 = vmatpush1.xpose.msra.mxu0 0.0
        %901 = vmatprep.subr.mxu0 0.0
        %902 = vmatpush1.xpose.msra.mxu0 0.0
        %903 = vmatprep.subr.mxu0 0.0
        %904 = vmatpush1.xpose.msra.mxu0 0.0
        %905 = vmatprep.subr.mxu0 0.0
        %906 = vmatpush1.xpose.msra.mxu0 0.0
        %907 = vmatprep.subr.mxu0 0.0
        %908 = vmatpush1.xpose.msra.mxu0 0.0
        %909 = vmatprep.subr.mxu0 0.0
        %910 = vmatpush1.xpose.msra.mxu0 0.0
        %911 = vmatprep.subr.mxu0 0.0
        %912 = vmatpush1.xpose.msra.mxu0 0.0
        %913 = vmatprep.subr.mxu0 0.0
        %914 = vmatpush1.xpose.msra.mxu0 0.0
        %915 = vmatprep.subr.mxu0 0.0
        %916 = vmatpush1.xpose.msra.mxu0 0.0
        %917 = vmatprep.subr.mxu0 0.0
        %918 = vmatpush1.xpose.msra.mxu0 0.0
        %919 = vmatprep.subr.mxu0 0.0
        %920 = vmatpush1.xpose.msra.mxu0 0.0
        %921 = vmatprep.subr.mxu0 0.0
        %922 = vmatpush1.xpose.msra.mxu0 0.0
        %923 = vmatprep.subr.mxu0 0.0
        %924 = vmatpush1.xpose.msra.mxu0 0.0
        %925 = vmatprep.subr.mxu0 0.0
        %926 = vmatpush1.xpose.msra.mxu0 0.0
        %927 = vmatprep.subr.mxu0 0.0
        %928 = vmatpush1.xpose.msra.mxu0 0.0
        %929 = vmatprep.subr.mxu0 0.0
        %930 = vmatpush1.xpose.msra.mxu0 0.0
        %931 = vmatprep.subr.mxu0 0.0
        %932 = vmatpush1.xpose.msra.mxu0 0.0
        %933 = vmatprep.subr.mxu0 0.0
        %934 = vmatpush1.xpose.msra.mxu0 0.0
        %935 = vmatprep.subr.mxu0 0.0
        %936 = vmatpush1.xpose.msra.mxu0 0.0
        %937 = vmatprep.subr.mxu0 0.0
        %938 = vmatpush1.xpose.msra.mxu0 0.0
        %939 = vmatprep.subr.mxu0 0.0
        %940 = vmatpush1.xpose.msra.mxu0 0.0
        %941 = vmatprep.subr.mxu0 0.0
        %942 = vmatpush1.xpose.msra.mxu0 0.0
        %943 = vmatprep.subr.mxu0 0.0
        %944 = vmatpush1.xpose.msra.mxu0 0.0
        %945 = vmatprep.subr.mxu0 0.0
        %946 = vmatpush1.xpose.msra.mxu0 0.0
        %947 = vmatprep.subr.mxu0 0.0
        %948 = vmatpush1.xpose.msra.mxu0 0.0
        %949 = vmatprep.subr.mxu0 0.0
        %950 = vmatpush1.xpose.msra.mxu0 0.0
        %951 = vmatprep.subr.mxu0 0.0
        %952 = vmatpush1.xpose.msra.mxu0 0.0
        %953 = vmatprep.subr.mxu0 0.0
        %954 = vmatpush1.xpose.msra.mxu0 0.0
        %955 = vmatprep.subr.mxu0 0.0
        %956 = vmatpush1.xpose.msra.mxu0 0.0
        %957 = vmatprep.subr.mxu0 0.0
        %958 = vmatpush1.xpose.msra.mxu0 0.0
        %959 = vmatprep.mubr.f32.mxu0 0.0
        %960 = vmatmul.mubr.f32.gmra.mrb[0].mxu0 %v887
        %v961 = vpop.f32.mrb[0].mxu0
        %v962 = vadd.f32 0.0, %v961
        %v963 = vpop.f32.mrb[0].mxu0
        %964 = vmatprep.mubr.f32.mxu0 0.0
        %965 = vmatmul.mubr.f32.gmra.mrb[0].mxu0 %v889
        %v966 = vpop.f32.mrb[0].mxu0
        %v967 = vadd.f32 0.0, %v966
        %v968 = vpop.f32.mrb[0].mxu0
        %969 = vdwg.mxu0
        %v970 = vmul.f32 %v962, 0.25
        %v971 = vmul.f32 %v967, 0.25
        %v972 = vsel %vm762, -1e+30, %v970
        %v973 = vsel %vm763, -1e+30, %v971
        %v974 = vsel %vm676, %v972, -inf
        %975 = vmax.xlane.f32.xlu0 %v974
        %v976 = vpop.xlane.xlu0 %975
        %v977 = vsel %vm676, %v973, -inf
        %978 = vmax.xlane.f32.xlu0 %v977
        %v979 = vpop.xlane.xlu0 %978
        %v980 = vsub.f32 %v972, %v976
        %v981 = vsub.f32 %v973, %v979
        %v982 = vmul.f32 %v980, 1.442695
        %v983 = vpow.pop %v982
        %v984 = vmul.f32 %v981, 1.442695
        %v985 = vpow.pop %v984
        %v986 = vsel %vm676, %v983, 0.0
        %987 = vadd.xlane.f32.xlu0 %v986
        %v988 = vpop.xlane.xlu0 %987
        %v989 = vsel %vm676, %v985, 0.0
        %990 = vadd.xlane.f32.xlu0 %v989
        %v991 = vpop.xlane.xlu0 %990
        %v992 = vrcp.pop %v988
        %v993 = vmul.f32 %v983, %v992
        %v994 = vrcp.pop %v991
        %v995 = vmul.f32 %v985, %v994
        %s996 = scalar_lea.vmem %s555, 16 [#allocation4]
        %997 = vst.msk [vmem:[%s996] sm:$0xff] %vm676, %v993
        %998 = vst.msk [vmem:[%s996 + $0x8] sm:$0xff] %vm676, %v995
        %999 = vrot.lane.b32.xlu0 %v662, 48
        %v1000 = vpop.permute.xlu0 %999
        %1001 = vrot.lane.b32.xlu0 %v667, 48
        %v1002 = vpop.permute.xlu0 %1001
        %v1006 = vsel %vm676, %v993, 0
        %v1009 = vsel %vm676, %v995, 0
        %1011 = vmatprep.subr.mxu0 0.0
        %1012 = vmatpush1.msra.mxu0 %v1000
        %1013 = vmatprep.subr.mxu0 0.0
        %1014 = vmatpush1.msra.mxu0 %v1002
        %1015 = vmatprep.subr.mxu0 0.0
        %1016 = vmatpush1.msra.mxu0 0.0
        %1017 = vmatprep.subr.mxu0 0.0
        %1018 = vmatpush1.msra.mxu0 0.0
        %1019 = vmatprep.subr.mxu0 0.0
        %1020 = vmatpush1.msra.mxu0 0.0
        %1021 = vmatprep.subr.mxu0 0.0
        %1022 = vmatpush1.msra.mxu0 0.0
        %1023 = vmatprep.subr.mxu0 0.0
        %1024 = vmatpush1.msra.mxu0 0.0
        %1025 = vmatprep.subr.mxu0 0.0
        %1026 = vmatpush1.msra.mxu0 0.0
        %1027 = vmatprep.subr.mxu0 0.0
        %1028 = vmatpush1.msra.mxu0 0.0
        %1029 = vmatprep.subr.mxu0 0.0
        %1030 = vmatpush1.msra.mxu0 0.0
        %1031 = vmatprep.subr.mxu0 0.0
        %1032 = vmatpush1.msra.mxu0 0.0
        %1033 = vmatprep.subr.mxu0 0.0
        %1034 = vmatpush1.msra.mxu0 0.0
        %1035 = vmatprep.subr.mxu0 0.0
        %1036 = vmatpush1.msra.mxu0 0.0
        %1037 = vmatprep.subr.mxu0 0.0
        %1038 = vmatpush1.msra.mxu0 0.0
        %1039 = vmatprep.subr.mxu0 0.0
        %1040 = vmatpush1.msra.mxu0 0.0
        %1041 = vmatprep.subr.mxu0 0.0
        %1042 = vmatpush1.msra.mxu0 0.0
        %1043 = vmatprep.subr.mxu0 0.0
        %1044 = vmatpush1.msra.mxu0 0.0
        %1045 = vmatprep.subr.mxu0 0.0
        %1046 = vmatpush1.msra.mxu0 0.0
        %1047 = vmatprep.subr.mxu0 0.0
        %1048 = vmatpush1.msra.mxu0 0.0
        %1049 = vmatprep.subr.mxu0 0.0
        %1050 = vmatpush1.msra.mxu0 0.0
        %1051 = vmatprep.subr.mxu0 0.0
        %1052 = vmatpush1.msra.mxu0 0.0
        %1053 = vmatprep.subr.mxu0 0.0
        %1054 = vmatpush1.msra.mxu0 0.0
        %1055 = vmatprep.subr.mxu0 0.0
        %1056 = vmatpush1.msra.mxu0 0.0
        %1057 = vmatprep.subr.mxu0 0.0
        %1058 = vmatpush1.msra.mxu0 0.0
        %1059 = vmatprep.subr.mxu0 0.0
        %1060 = vmatpush1.msra.mxu0 0.0
        %1061 = vmatprep.subr.mxu0 0.0
        %1062 = vmatpush1.msra.mxu0 0.0
        %1063 = vmatprep.subr.mxu0 0.0
        %1064 = vmatpush1.msra.mxu0 0.0
        %1065 = vmatprep.subr.mxu0 0.0
        %1066 = vmatpush1.msra.mxu0 0.0
        %1067 = vmatprep.subr.mxu0 0.0
        %1068 = vmatpush1.msra.mxu0 0.0
        %1069 = vmatprep.subr.mxu0 0.0
        %1070 = vmatpush1.msra.mxu0 0.0
        %1071 = vmatprep.subr.mxu0 0.0
        %1072 = vmatpush1.msra.mxu0 0.0
        %1073 = vmatprep.subr.mxu0 0.0
        %1074 = vmatpush1.msra.mxu0 0.0
        %1075 = vmatprep.mubr.f32.mxu0 0.0
        %1076 = vmatmul.mubr.f32.gmra.mrb[0].mxu0 %v1006
        %v1077 = vpop.f32.mrb[0].mxu0
        %v1078 = vadd.f32 0.0, %v1077
        %v1079 = vpop.f32.mrb[0].mxu0
        %1080 = vmatprep.mubr.f32.mxu0 0.0
        %1081 = vmatmul.mubr.f32.gmra.mrb[0].mxu0 %v1009
        %v1082 = vpop.f32.mrb[0].mxu0
        %v1083 = vadd.f32 0.0, %v1082
        %v1084 = vpop.f32.mrb[0].mxu0
        %1085 = vdwg.mxu0
        %v1086 = vld [vmem:[%s5 + $0x10] sm:$0xff]
        %v1087 = vld [vmem:[%s5 + $0x18] sm:$0xff]
        %v1089 = vsel %vm676, %v1078, 0
        %v1092 = vsel %vm676, %v1083, 0
        %1094 = vmatprep.subr.mxu0 0.0
        %1095 = vmatpush1.msra.mxu0 %v1086
        %1096 = vmatprep.subr.mxu0 0.0
        %1097 = vmatpush1.msra.mxu0 %v1087
        %1098 = vmatprep.subr.mxu0 0.0
        %1099 = vmatpush1.msra.mxu0 0.0
        %1100 = vmatprep.subr.mxu0 0.0
        %1101 = vmatpush1.msra.mxu0 0.0
        %1102 = vmatprep.subr.mxu0 0.0
        %1103 = vmatpush1.msra.mxu0 0.0
        %1104 = vmatprep.subr.mxu0 0.0
        %1105 = vmatpush1.msra.mxu0 0.0
        %1106 = vmatprep.subr.mxu0 0.0
        %1107 = vmatpush1.msra.mxu0 0.0
        %1108 = vmatprep.subr.mxu0 0.0
        %1109 = vmatpush1.msra.mxu0 0.0
        %1110 = vmatprep.subr.mxu0 0.0
        %1111 = vmatpush1.msra.mxu0 0.0
        %1112 = vmatprep.subr.mxu0 0.0
        %1113 = vmatpush1.msra.mxu0 0.0
        %1114 = vmatprep.subr.mxu0 0.0
        %1115 = vmatpush1.msra.mxu0 0.0
        %1116 = vmatprep.subr.mxu0 0.0
        %1117 = vmatpush1.msra.mxu0 0.0
        %1118 = vmatprep.subr.mxu0 0.0
        %1119 = vmatpush1.msra.mxu0 0.0
        %1120 = vmatprep.subr.mxu0 0.0
        %1121 = vmatpush1.msra.mxu0 0.0
        %1122 = vmatprep.subr.mxu0 0.0
        %1123 = vmatpush1.msra.mxu0 0.0
        %1124 = vmatprep.subr.mxu0 0.0
        %1125 = vmatpush1.msra.mxu0 0.0
        %1126 = vmatprep.subr.mxu0 0.0
        %1127 = vmatpush1.msra.mxu0 0.0
        %1128 = vmatprep.subr.mxu0 0.0
        %1129 = vmatpush1.msra.mxu0 0.0
        %1130 = vmatprep.subr.mxu0 0.0
        %1131 = vmatpush1.msra.mxu0 0.0
        %1132 = vmatprep.subr.mxu0 0.0
        %1133 = vmatpush1.msra.mxu0 0.0
        %1134 = vmatprep.subr.mxu0 0.0
        %1135 = vmatpush1.msra.mxu0 0.0
        %1136 = vmatprep.subr.mxu0 0.0
        %1137 = vmatpush1.msra.mxu0 0.0
        %1138 = vmatprep.subr.mxu0 0.0
        %1139 = vmatpush1.msra.mxu0 0.0
        %1140 = vmatprep.subr.mxu0 0.0
        %1141 = vmatpush1.msra.mxu0 0.0
        %1142 = vmatprep.subr.mxu0 0.0
        %1143 = vmatpush1.msra.mxu0 0.0
        %1144 = vmatprep.subr.mxu0 0.0
        %1145 = vmatpush1.msra.mxu0 0.0
        %1146 = vmatprep.subr.mxu0 0.0
        %1147 = vmatpush1.msra.mxu0 0.0
        %1148 = vmatprep.subr.mxu0 0.0
        %1149 = vmatpush1.msra.mxu0 0.0
        %1150 = vmatprep.subr.mxu0 0.0
        %1151 = vmatpush1.msra.mxu0 0.0
        %1152 = vmatprep.subr.mxu0 0.0
        %1153 = vmatpush1.msra.mxu0 0.0
        %1154 = vmatprep.subr.mxu0 0.0
        %1155 = vmatpush1.msra.mxu0 0.0
        %1156 = vmatprep.subr.mxu0 0.0
        %1157 = vmatpush1.msra.mxu0 0.0
        %1158 = vmatprep.mubr.f32.mxu0 0.0
        %1159 = vmatmul.mubr.f32.gmra.mrb[0].mxu0 %v1089
        %v1160 = vpop.f32.mrb[0].mxu0
        %v1161 = vadd.f32 0.0, %v1160
        %v1162 = vpop.f32.mrb[0].mxu0
        %1163 = vmatprep.mubr.f32.mxu0 0.0
        %1164 = vmatmul.mubr.f32.gmra.mrb[0].mxu0 %v1092
        %v1165 = vpop.f32.mrb[0].mxu0
        %v1166 = vadd.f32 0.0, %v1165
        %v1167 = vpop.f32.mrb[0].mxu0
        %1168 = vdwg.mxu0
        %v1170 = vsel %vm676, %v869, 0
        %v1173 = vsel %vm676, %v874, 0
        %1175 = vmatprep.subr.mxu0 0.0
        %1176 = vmatpush1.msra.mxu0 %v877
        %1177 = vmatprep.subr.mxu0 0.0
        %1178 = vmatpush1.msra.mxu0 %v878
        %1179 = vmatprep.subr.mxu0 0.0
        %1180 = vmatpush1.msra.mxu0 0.0
        %1181 = vmatprep.subr.mxu0 0.0
        %1182 = vmatpush1.msra.mxu0 0.0
        %1183 = vmatprep.subr.mxu0 0.0
        %1184 = vmatpush1.msra.mxu0 0.0
        %1185 = vmatprep.subr.mxu0 0.0
        %1186 = vmatpush1.msra.mxu0 0.0
        %1187 = vmatprep.subr.mxu0 0.0
        %1188 = vmatpush1.msra.mxu0 0.0
        %1189 = vmatprep.subr.mxu0 0.0
        %1190 = vmatpush1.msra.mxu0 0.0
        %1191 = vmatprep.subr.mxu0 0.0
        %1192 = vmatpush1.msra.mxu0 0.0
        %1193 = vmatprep.subr.mxu0 0.0
        %1194 = vmatpush1.msra.mxu0 0.0
        %1195 = vmatprep.subr.mxu0 0.0
        %1196 = vmatpush1.msra.mxu0 0.0
        %1197 = vmatprep.subr.mxu0 0.0
        %1198 = vmatpush1.msra.mxu0 0.0
        %1199 = vmatprep.subr.mxu0 0.0
        %1200 = vmatpush1.msra.mxu0 0.0
        %1201 = vmatprep.subr.mxu0 0.0
        %1202 = vmatpush1.msra.mxu0 0.0
        %1203 = vmatprep.subr.mxu0 0.0
        %1204 = vmatpush1.msra.mxu0 0.0
        %1205 = vmatprep.subr.mxu0 0.0
        %1206 = vmatpush1.msra.mxu0 0.0
        %1207 = vmatprep.subr.mxu0 0.0
        %1208 = vmatpush1.msra.mxu0 0.0
        %1209 = vmatprep.subr.mxu0 0.0
        %1210 = vmatpush1.msra.mxu0 0.0
        %1211 = vmatprep.subr.mxu0 0.0
        %1212 = vmatpush1.msra.mxu0 0.0
        %1213 = vmatprep.subr.mxu0 0.0
        %1214 = vmatpush1.msra.mxu0 0.0
        %1215 = vmatprep.subr.mxu0 0.0
        %1216 = vmatpush1.msra.mxu0 0.0
        %1217 = vmatprep.subr.mxu0 0.0
        %1218 = vmatpush1.msra.mxu0 0.0
        %1219 = vmatprep.subr.mxu0 0.0
        %1220 = vmatpush1.msra.mxu0 0.0
        %1221 = vmatprep.subr.mxu0 0.0
        %1222 = vmatpush1.msra.mxu0 0.0
        %1223 = vmatprep.subr.mxu0 0.0
        %1224 = vmatpush1.msra.mxu0 0.0
        %1225 = vmatprep.subr.mxu0 0.0
        %1226 = vmatpush1.msra.mxu0 0.0
        %1227 = vmatprep.subr.mxu0 0.0
        %1228 = vmatpush1.msra.mxu0 0.0
        %1229 = vmatprep.subr.mxu0 0.0
        %1230 = vmatpush1.msra.mxu0 0.0
        %1231 = vmatprep.subr.mxu0 0.0
        %1232 = vmatpush1.msra.mxu0 0.0
        %1233 = vmatprep.subr.mxu0 0.0
        %1234 = vmatpush1.msra.mxu0 0.0
        %1235 = vmatprep.subr.mxu0 0.0
        %1236 = vmatpush1.msra.mxu0 0.0
        %1237 = vmatprep.subr.mxu0 0.0
        %1238 = vmatpush1.msra.mxu0 0.0
        %1239 = vmatprep.mubr.f32.mxu0 0.0
        %1240 = vmatmul.mubr.f32.gmra.mrb[0].mxu0 %v1170
        %v1241 = vpop.f32.mrb[0].mxu0
        %v1242 = vadd.f32 %v1161, %v1241
        %v1243 = vpop.f32.mrb[0].mxu0
        %1244 = vmatprep.mubr.f32.mxu0 0.0
        %1245 = vmatmul.mubr.f32.gmra.mrb[0].mxu0 %v1173
        %v1246 = vpop.f32.mrb[0].mxu0
        %v1247 = vadd.f32 %v1166, %v1246
        %v1248 = vpop.f32.mrb[0].mxu0
        %1249 = vdwg.mxu0
        %v1250 = vld [vmem:[%s6] sm:$0x1]
        %v1252 = vlaneseq
        %v1253 = vshrl.u32 %v1252, 7
        %v1254 = vsub.s32 0, %v1253
        %v1255 = vrot.slane %v1250, %v1254
        %v1257 = vadd.f32 %v1242, %v1255
        %v1258 = vadd.f32 %v1247, %v1255
        %v1259 = vadd.f32 %v1257, %v571
        %v1260 = vadd.f32 %v1258, %v572
        %v1261 = vld [vmem:[%s7] sm:$0x1]
        %v1262 = vld [vmem:[%s8] sm:$0x1]
        %v1263 = vsel %vm588, %v1259, 0.0
        %1264 = vadd.xlane.f32.xlu0 %v1263
        %v1265 = vpop.xlane.xlu0 %1264
        %v1266 = vsel %vm588, %v1260, 0.0
        %1267 = vadd.xlane.f32.xlu0 %v1266
        %v1268 = vpop.xlane.xlu0 %1267
        %v1269 = vrcp.pop 32.0
        %v1270 = vmul.f32 %v1265, %v1269
        %v1271 = vmul.f32 %v1268, %v1269
        %v1272 = vsub.f32 %v1259, %v1270
        %v1273 = vsub.f32 %v1260, %v1271
        %v1274 = vmul.f32 %v1272, %v1272
        %v1275 = vmul.f32 %v1273, %v1273
        %v1276 = vsel %vm588, %v1274, 0.0
        %1277 = vadd.xlane.f32.xlu0 %v1276
        %v1278 = vpop.xlane.xlu0 %1277
        %v1279 = vsel %vm588, %v1275, 0.0
        %1280 = vadd.xlane.f32.xlu0 %v1279
        %v1281 = vpop.xlane.xlu0 %1280
        %v1282 = vmul.f32 %v1278, %v1269
        %v1283 = vmul.f32 %v1281, %v1269
        %v1284 = vadd.f32 %v1282, 1e-05
        %v1285 = vadd.f32 %v1283, 1e-05
        %v1286 = vrsqrt.pop %v1284
        %v1287 = vrsqrt.pop %v1285
        %v1288 = vmul.f32 %v1272, %v1286
        %v1289 = vmul.f32 %v1273, %v1287
        %v1291 = vlaneseq
        %v1292 = vshrl.u32 %v1291, 7
        %v1293 = vsub.s32 0, %v1292
        %v1294 = vrot.slane %v1261, %v1293
        %v1296 = vmul.f32 %v1288, %v1294
        %v1297 = vmul.f32 %v1289, %v1294
        %v1299 = vlaneseq
        %v1300 = vshrl.u32 %v1299, 7
        %v1301 = vsub.s32 0, %v1300
        %v1302 = vrot.slane %v1262, %v1301
        %v1304 = vadd.f32 %v1296, %v1302
        %v1305 = vadd.f32 %v1297, %v1302
        %1307 = vset.pattern.permute.xlu0 0
        %1308 = vperm.xlu0 %1307, %v575
        %v1309 = vpop.permute.xlu0 %1308
        %1312 = vset.pattern.permute.xlu0 0
        %1313 = vperm.xlu0 %1312, %v576
        %v1314 = vpop.permute.xlu0 %1313
        %v1316 = vmul.f32 %v1304, %v1309
        %v1317 = vmul.f32 %v1305, %v1314
        %vm1320 = vcmask 1043456
        %v1321 = vrot.slane %v1316, 4
        %v1322 = vrot.slane %v1317, 4
        %v1323 = vsel %vm1320, %v1321, %v1322
        %v1327 = vsel %vm1320, 0.0, %v1321
        %v1328 = vsel %vm1320, %v1322, 0.0
        %vm1331 = vcmask 1046528
        %v1332 = vrot.slane %v1327, 1
        %v1333 = vrot.slane %v1323, 1
        %v1334 = vsel %vm1331, %v1332, %v1333
        %v1335 = vrot.slane %v1328, 1
        %v1336 = vsel %vm1331, %v1333, %v1335
        %1337 = vrot.lane.b32.xlu0 %v1334, 32
        %v1338 = vpop.permute.xlu0 %1337
        %1339 = vrot.lane.b32.xlu0 %v1336, 32
        %v1340 = vpop.permute.xlu0 %1339
        %vm1343 = vcmask 1045504
        %v1344 = vrot.slane %v1327, 2
        %v1345 = vrot.slane %v1323, 2
        %v1346 = vsel %vm1343, %v1344, %v1345
        %v1347 = vrot.slane %v1328, 2
        %v1348 = vsel %vm1343, %v1345, %v1347
        %1349 = vrot.lane.b32.xlu0 %v1346, 64
        %v1350 = vpop.permute.xlu0 %1349
        %1351 = vrot.lane.b32.xlu0 %v1348, 64
        %v1352 = vpop.permute.xlu0 %1351
        %vm1355 = vcmask 1044480
        %v1356 = vrot.slane %v1327, 3
        %v1357 = vrot.slane %v1323, 3
        %v1358 = vsel %vm1355, %v1356, %v1357
        %v1359 = vrot.slane %v1328, 3
        %v1360 = vsel %vm1355, %v1357, %v1359
        %1361 = vrot.lane.b32.xlu0 %v1358, 96
        %v1362 = vpop.permute.xlu0 %1361
        %1363 = vrot.lane.b32.xlu0 %v1360, 96
        %v1364 = vpop.permute.xlu0 %1363
        %v1367 = vrot.slane %v1327, 4
        %v1368 = vrot.slane %v1323, 4
        %v1369 = vsel %vm1320, %v1367, %v1368
        %v1370 = vrot.slane %v1328, 4
        %v1371 = vsel %vm1320, %v1368, %v1370
        %vm1374 = vcmask 1042432
        %v1375 = vrot.slane %v1327, 5
        %v1376 = vrot.slane %v1323, 5
        %v1377 = vsel %vm1374, %v1375, %v1376
        %v1378 = vrot.slane %v1328, 5
        %v1379 = vsel %vm1374, %v1376, %v1378
        %1380 = vrot.lane.b32.xlu0 %v1377, 32
        %v1381 = vpop.permute.xlu0 %1380
        %1382 = vrot.lane.b32.xlu0 %v1379, 32
        %v1383 = vpop.permute.xlu0 %1382
        %vm1386 = vcmask 1041408
        %v1387 = vrot.slane %v1327, 6
        %v1388 = vrot.slane %v1323, 6
        %v1389 = vsel %vm1386, %v1387, %v1388
        %v1390 = vrot.slane %v1328, 6
        %v1391 = vsel %vm1386, %v1388, %v1390
        %1392 = vrot.lane.b32.xlu0 %v1389, 64
        %v1393 = vpop.permute.xlu0 %1392
        %1394 = vrot.lane.b32.xlu0 %v1391, 64
        %v1395 = vpop.permute.xlu0 %1394
        %vm1398 = vcmask 1040384
        %v1399 = vrot.slane %v1327, 7
        %v1400 = vrot.slane %v1323, 7
        %v1401 = vsel %vm1398, %v1399, %v1400
        %v1402 = vrot.slane %v1328, 7
        %v1403 = vsel %vm1398, %v1400, %v1402
        %1404 = vrot.lane.b32.xlu0 %v1401, 96
        %v1405 = vpop.permute.xlu0 %1404
        %1406 = vrot.lane.b32.xlu0 %v1403, 96
        %v1407 = vpop.permute.xlu0 %1406
        %v1410 = vsel %vm588, %v1327, %v1338
        %v1411 = vsel %vm588, %v1323, %v1340
        %vm1412 = vcmask 523264
        %v1413 = vsel %vm1412, %v1410, %v1350
        %v1414 = vsel %vm1412, %v1411, %v1352
        %vm1415 = vcmask 785408
        %v1416 = vsel %vm1415, %v1413, %v1362
        %v1417 = vsel %vm1415, %v1414, %v1364
        %v1418 = vsel %vm588, %v1369, %v1381
        %v1419 = vsel %vm588, %v1371, %v1383
        %v1420 = vsel %vm1412, %v1418, %v1393
        %v1421 = vsel %vm1412, %v1419, %v1395
        %v1422 = vsel %vm1415, %v1420, %v1405
        %v1423 = vsel %vm1415, %v1421, %v1407
        %v1424 = vld [vmem:[%s9] sm:$0xff]
        %v1425 = vld [vmem:[%s9 + $0x8] sm:$0xff]
        %v1426 = vld [vmem:[%s9 + $0x10] sm:$0xff]
        %v1427 = vld [vmem:[%s9 + $0x18] sm:$0xff]
        %v1428 = vld [vmem:[%s9 + $0x20] sm:$0xff]
        %v1429 = vld [vmem:[%s9 + $0x28] sm:$0xff]
        %v1430 = vld [vmem:[%s9 + $0x30] sm:$0xff]
        %v1431 = vld [vmem:[%s9 + $0x38] sm:$0xff]
        %v1432 = vld [vmem:[%s9 + $0x40] sm:$0xff]
        %v1433 = vld [vmem:[%s9 + $0x48] sm:$0xff]
        %v1434 = vld [vmem:[%s9 + $0x50] sm:$0xff]
        %v1435 = vld [vmem:[%s9 + $0x58] sm:$0xff]
        %v1436 = vld [vmem:[%s9 + $0x60] sm:$0xff]
        %v1437 = vld [vmem:[%s9 + $0x68] sm:$0xff]
        %v1438 = vld [vmem:[%s9 + $0x70] sm:$0xff]
        %v1439 = vld [vmem:[%s9 + $0x78] sm:$0xff]
        %v1440 = vld [vmem:[%s9 + $0x80] sm:$0xff]
        %v1441 = vld [vmem:[%s9 + $0x88] sm:$0xff]
        %v1442 = vld [vmem:[%s9 + $0x90] sm:$0xff]
        %v1443 = vld [vmem:[%s9 + $0x98] sm:$0xff]
        %v1444 = vld [vmem:[%s9 + $0xa0] sm:$0xff]
        %v1445 = vld [vmem:[%s9 + $0xa8] sm:$0xff]
        %v1446 = vld [vmem:[%s9 + $0xb0] sm:$0xff]
        %v1447 = vld [vmem:[%s9 + $0xb8] sm:$0xff]
        %v1448 = vld [vmem:[%s9 + $0xc0] sm:$0xff]
        %v1449 = vld [vmem:[%s9 + $0xc8] sm:$0xff]
        %v1450 = vld [vmem:[%s9 + $0xd0] sm:$0xff]
        %v1451 = vld [vmem:[%s9 + $0xd8] sm:$0xff]
        %v1452 = vld [vmem:[%s9 + $0xe0] sm:$0xff]
        %v1453 = vld [vmem:[%s9 + $0xe8] sm:$0xff]
        %v1454 = vld [vmem:[%s9 + $0xf0] sm:$0xff]
        %v1455 = vld [vmem:[%s9 + $0xf8] sm:$0xff]
        %v1456 = vld [vmem:[%s9 + $0x100] sm:$0xff]
        %v1457 = vld [vmem:[%s9 + $0x108] sm:$0xff]
        %v1458 = vld [vmem:[%s9 + $0x110] sm:$0xff]
        %v1459 = vld [vmem:[%s9 + $0x118] sm:$0xff]
        %v1460 = vld [vmem:[%s10] sm:$0x1]
        %v1462 = vlaneseq
        %v1463 = vshrl.u32 %v1462, 7
        %v1464 = vsub.s32 0, %v1463
        %v1465 = vrot.slane %v1460, %v1464
        %v1467 = vsel %vm588, %v1323, 0
        %v1469 = vsel %vm588, %v1328, 0
        %1471 = vmatprep.subr.mxu0 0.0
        %1472 = vmatpush1.msra.mxu0 %v1424
        %1473 = vmatprep.subr.mxu0 0.0
        %1474 = vmatpush1.msra.mxu0 %v1425
        %1475 = vmatprep.subr.mxu0 0.0
        %1476 = vmatpush1.msra.mxu0 %v1426
        %1477 = vmatprep.subr.mxu0 0.0
        %1478 = vmatpush1.msra.mxu0 %v1427
        %1479 = vmatprep.subr.mxu0 0.0
        %1480 = vmatpush1.msra.mxu0 %v1428
        %1481 = vmatprep.subr.mxu0 0.0
        %1482 = vmatpush1.msra.mxu0 %v1429
        %1483 = vmatprep.subr.mxu0 0.0
        %1484 = vmatpush1.msra.mxu0 %v1430
        %1485 = vmatprep.subr.mxu0 0.0
        %1486 = vmatpush1.msra.mxu0 %v1431
        %1487 = vmatprep.subr.mxu0 0.0
        %1488 = vmatpush1.msra.mxu0 %v1432
        %1489 = vmatprep.subr.mxu0 0.0
        %1490 = vmatpush1.msra.mxu0 %v1433
        %1491 = vmatprep.subr.mxu0 0.0
        %1492 = vmatpush1.msra.mxu0 %v1434
        %1493 = vmatprep.subr.mxu0 0.0
        %1494 = vmatpush1.msra.mxu0 %v1435
        %1495 = vmatprep.subr.mxu0 0.0
        %1496 = vmatpush1.msra.mxu0 %v1436
        %1497 = vmatprep.subr.mxu0 0.0
        %1498 = vmatpush1.msra.mxu0 %v1437
        %1499 = vmatprep.subr.mxu0 0.0
        %1500 = vmatpush1.msra.mxu0 %v1438
        %1501 = vmatprep.subr.mxu0 0.0
        %1502 = vmatpush1.msra.mxu0 %v1439
        %1503 = vmatprep.subr.mxu0 0.0
        %1504 = vmatpush1.msra.mxu0 %v1440
        %1505 = vmatprep.subr.mxu0 0.0
        %1506 = vmatpush1.msra.mxu0 %v1441
        %1507 = vmatprep.subr.mxu0 0.0
        %1508 = vmatpush1.msra.mxu0 %v1442
        %1509 = vmatprep.subr.mxu0 0.0
        %1510 = vmatpush1.msra.mxu0 %v1443
        %1511 = vmatprep.subr.mxu0 0.0
        %1512 = vmatpush1.msra.mxu0 %v1444
        %1513 = vmatprep.subr.mxu0 0.0
        %1514 = vmatpush1.msra.mxu0 %v1445
        %1515 = vmatprep.subr.mxu0 0.0
        %1516 = vmatpush1.msra.mxu0 %v1446
        %1517 = vmatprep.subr.mxu0 0.0
        %1518 = vmatpush1.msra.mxu0 %v1447
        %1519 = vmatprep.subr.mxu0 0.0
        %1520 = vmatpush1.msra.mxu0 %v1448
        %1521 = vmatprep.subr.mxu0 0.0
        %1522 = vmatpush1.msra.mxu0 %v1449
        %1523 = vmatprep.subr.mxu0 0.0
        %1524 = vmatpush1.msra.mxu0 %v1450
        %1525 = vmatprep.subr.mxu0 0.0
        %1526 = vmatpush1.msra.mxu0 %v1451
        %1527 = vmatprep.subr.mxu0 0.0
        %1528 = vmatpush1.msra.mxu0 %v1452
        %1529 = vmatprep.subr.mxu0 0.0
        %1530 = vmatpush1.msra.mxu0 %v1453
        %1531 = vmatprep.subr.mxu0 0.0
        %1532 = vmatpush1.msra.mxu0 %v1454
        %1533 = vmatprep.subr.mxu0 0.0
        %1534 = vmatpush1.msra.mxu0 %v1455
        %1535 = vmatprep.mubr.f32.mxu0 %v1422
        %1536 = vmatmul.mubr.f32.gmra.mrb[0].mxu0 %v1416
        %v1537 = vpop.f32.mrb[0].mxu0
        %v1538 = vadd.f32 %v1465, %v1537
        %v1539 = vpop.f32.mrb[0].mxu0
        %1540 = vmatprep.mubr.f32.mxu0 %v1423
        %1541 = vmatmul.mubr.f32.gmra.mrb[0].mxu0 %v1417
        %v1542 = vpop.f32.mrb[0].mxu0
        %v1543 = vadd.f32 %v1465, %v1542
        %v1544 = vpop.f32.mrb[0].mxu0
        %1545 = vdwg.mxu0
        %1546 = vmatprep.subr.mxu0 0.0
        %1547 = vmatpush1.msra.mxu0 %v1456
        %1548 = vmatprep.subr.mxu0 0.0
        %1549 = vmatpush1.msra.mxu0 %v1457
        %1550 = vmatprep.subr.mxu0 0.0
        %1551 = vmatpush1.msra.mxu0 %v1458
        %1552 = vmatprep.subr.mxu0 0.0
        %1553 = vmatpush1.msra.mxu0 %v1459
        %1554 = vmatprep.subr.mxu0 0.0
        %1555 = vmatpush1.msra.mxu0 0.0
        %1556 = vmatprep.subr.mxu0 0.0
        %1557 = vmatpush1.msra.mxu0 0.0
        %1558 = vmatprep.subr.mxu0 0.0
        %1559 = vmatpush1.msra.mxu0 0.0
        %1560 = vmatprep.subr.mxu0 0.0
        %1561 = vmatpush1.msra.mxu0 0.0
        %1562 = vmatprep.subr.mxu0 0.0
        %1563 = vmatpush1.msra.mxu0 0.0
        %1564 = vmatprep.subr.mxu0 0.0
        %1565 = vmatpush1.msra.mxu0 0.0
        %1566 = vmatprep.subr.mxu0 0.0
        %1567 = vmatpush1.msra.mxu0 0.0
        %1568 = vmatprep.subr.mxu0 0.0
        %1569 = vmatpush1.msra.mxu0 0.0
        %1570 = vmatprep.subr.mxu0 0.0
        %1571 = vmatpush1.msra.mxu0 0.0
        %1572 = vmatprep.subr.mxu0 0.0
        %1573 = vmatpush1.msra.mxu0 0.0
        %1574 = vmatprep.subr.mxu0 0.0
        %1575 = vmatpush1.msra.mxu0 0.0
        %1576 = vmatprep.subr.mxu0 0.0
        %1577 = vmatpush1.msra.mxu0 0.0
        %1578 = vmatprep.subr.mxu0 0.0
        %1579 = vmatpush1.msra.mxu0 0.0
        %1580 = vmatprep.subr.mxu0 0.0
        %1581 = vmatpush1.msra.mxu0 0.0
        %1582 = vmatprep.subr.mxu0 0.0
        %1583 = vmatpush1.msra.mxu0 0.0
        %1584 = vmatprep.subr.mxu0 0.0
        %1585 = vmatpush1.msra.mxu0 0.0
        %1586 = vmatprep.subr.mxu0 0.0
        %1587 = vmatpush1.msra.mxu0 0.0
        %1588 = vmatprep.subr.mxu0 0.0
        %1589 = vmatpush1.msra.mxu0 0.0
        %1590 = vmatprep.subr.mxu0 0.0
        %1591 = vmatpush1.msra.mxu0 0.0
        %1592 = vmatprep.subr.mxu0 0.0
        %1593 = vmatpush1.msra.mxu0 0.0
        %1594 = vmatprep.subr.mxu0 0.0
        %1595 = vmatpush1.msra.mxu0 0.0
        %1596 = vmatprep.subr.mxu0 0.0
        %1597 = vmatpush1.msra.mxu0 0.0
        %1598 = vmatprep.subr.mxu0 0.0
        %1599 = vmatpush1.msra.mxu0 0.0
        %1600 = vmatprep.subr.mxu0 0.0
        %1601 = vmatpush1.msra.mxu0 0.0
        %1602 = vmatprep.subr.mxu0 0.0
        %1603 = vmatpush1.msra.mxu0 0.0
        %1604 = vmatprep.subr.mxu0 0.0
        %1605 = vmatpush1.msra.mxu0 0.0
        %1606 = vmatprep.subr.mxu0 0.0
        %1607 = vmatpush1.msra.mxu0 0.0
        %1608 = vmatprep.subr.mxu0 0.0
        %1609 = vmatpush1.msra.mxu0 0.0
        %1610 = vmatprep.mubr.f32.mxu0 0.0
        %1611 = vmatmul.mubr.f32.gmra.mrb[0].mxu0 %v1467
        %v1612 = vpop.f32.mrb[0].mxu0
        %v1613 = vadd.f32 %v1538, %v1612
        %v1614 = vpop.f32.mrb[0].mxu0
        %1615 = vmatprep.mubr.f32.mxu0 0.0
        %1616 = vmatmul.mubr.f32.gmra.mrb[0].mxu0 %v1469
        %v1617 = vpop.f32.mrb[0].mxu0
        %v1618 = vadd.f32 %v1543, %v1617
        %v1619 = vpop.f32.mrb[0].mxu0
        %1620 = vdwg.mxu0
        %v1621 = vmax.f32 %v1613, 0.0
        %v1622 = vmax.f32 %v1618, 0.0
        %v1623 = vld [vmem:[%s11] sm:$0xff]
        %v1624 = vld [vmem:[%s11 + $0x8] sm:$0xff]
        %v1625 = vld [vmem:[%s11 + $0x10] sm:$0xff]
        %v1626 = vld [vmem:[%s11 + $0x18] sm:$0xff]
        %v1627 = vld [vmem:[%s11 + $0x20] sm:$0xff]
        %v1628 = vld [vmem:[%s11 + $0x28] sm:$0xff]
        %v1629 = vld [vmem:[%s11 + $0x30] sm:$0xff]
        %v1630 = vld [vmem:[%s11 + $0x38] sm:$0xff]
        %v1631 = vld [vmem:[%s12] sm:$0x1]
        %v1633 = vlaneseq
        %v1634 = vshrl.u32 %v1633, 7
        %v1635 = vsub.s32 0, %v1634
        %v1636 = vrot.slane %v1631, %v1635
        %v1639 = vsel %vm1412, %v1621, 0
        %v1642 = vsel %vm1412, %v1622, 0
        %1644 = vmatprep.subr.mxu0 0.0
        %1645 = vmatpush1.msra.mxu0 %v1623
        %1646 = vmatprep.subr.mxu0 0.0
        %1647 = vmatpush1.msra.mxu0 %v1624
        %1648 = vmatprep.subr.mxu0 0.0
        %1649 = vmatpush1.msra.mxu0 %v1625
        %1650 = vmatprep.subr.mxu0 0.0
        %1651 = vmatpush1.msra.mxu0 %v1626
        %1652 = vmatprep.subr.mxu0 0.0
        %1653 = vmatpush1.msra.mxu0 %v1627
        %1654 = vmatprep.subr.mxu0 0.0
        %1655 = vmatpush1.msra.mxu0 %v1628
        %1656 = vmatprep.subr.mxu0 0.0
        %1657 = vmatpush1.msra.mxu0 %v1629
        %1658 = vmatprep.subr.mxu0 0.0
        %1659 = vmatpush1.msra.mxu0 %v1630
        %1660 = vmatprep.subr.mxu0 0.0
        %1661 = vmatpush1.msra.mxu0 0.0
        %1662 = vmatprep.subr.mxu0 0.0
        %1663 = vmatpush1.msra.mxu0 0.0
        %1664 = vmatprep.subr.mxu0 0.0
        %1665 = vmatpush1.msra.mxu0 0.0
        %1666 = vmatprep.subr.mxu0 0.0
        %1667 = vmatpush1.msra.mxu0 0.0
        %1668 = vmatprep.subr.mxu0 0.0
        %1669 = vmatpush1.msra.mxu0 0.0
        %1670 = vmatprep.subr.mxu0 0.0
        %1671 = vmatpush1.msra.mxu0 0.0
        %1672 = vmatprep.subr.mxu0 0.0
        %1673 = vmatpush1.msra.mxu0 0.0
        %1674 = vmatprep.subr.mxu0 0.0
        %1675 = vmatpush1.msra.mxu0 0.0
        %1676 = vmatprep.subr.mxu0 0.0
        %1677 = vmatpush1.msra.mxu0 0.0
        %1678 = vmatprep.subr.mxu0 0.0
        %1679 = vmatpush1.msra.mxu0 0.0
        %1680 = vmatprep.subr.mxu0 0.0
        %1681 = vmatpush1.msra.mxu0 0.0
        %1682 = vmatprep.subr.mxu0 0.0
        %1683 = vmatpush1.msra.mxu0 0.0
        %1684 = vmatprep.subr.mxu0 0.0
        %1685 = vmatpush1.msra.mxu0 0.0
        %1686 = vmatprep.subr.mxu0 0.0
        %1687 = vmatpush1.msra.mxu0 0.0
        %1688 = vmatprep.subr.mxu0 0.0
        %1689 = vmatpush1.msra.mxu0 0.0
        %1690 = vmatprep.subr.mxu0 0.0
        %1691 = vmatpush1.msra.mxu0 0.0
        %1692 = vmatprep.subr.mxu0 0.0
        %1693 = vmatpush1.msra.mxu0 0.0
        %1694 = vmatprep.subr.mxu0 0.0
        %1695 = vmatpush1.msra.mxu0 0.0
        %1696 = vmatprep.subr.mxu0 0.0
        %1697 = vmatpush1.msra.mxu0 0.0
        %1698 = vmatprep.subr.mxu0 0.0
        %1699 = vmatpush1.msra.mxu0 0.0
        %1700 = vmatprep.subr.mxu0 0.0
        %1701 = vmatpush1.msra.mxu0 0.0
        %1702 = vmatprep.subr.mxu0 0.0
        %1703 = vmatpush1.msra.mxu0 0.0
        %1704 = vmatprep.subr.mxu0 0.0
        %1705 = vmatpush1.msra.mxu0 0.0
        %1706 = vmatprep.subr.mxu0 0.0
        %1707 = vmatpush1.msra.mxu0 0.0
        %1708 = vmatprep.mubr.f32.mxu0 0.0
        %1709 = vmatmul.mubr.f32.gmra.mrb[0].mxu0 %v1639
        %v1710 = vpop.f32.mrb[0].mxu0
        %v1711 = vadd.f32 %v1636, %v1710
        %v1712 = vpop.f32.mrb[0].mxu0
        %1713 = vmatprep.mubr.f32.mxu0 0.0
        %1714 = vmatmul.mubr.f32.gmra.mrb[0].mxu0 %v1642
        %v1715 = vpop.f32.mrb[0].mxu0
        %v1716 = vadd.f32 %v1636, %v1715
        %v1717 = vpop.f32.mrb[0].mxu0
        %1718 = vdwg.mxu0
        %v1719 = vadd.f32 %v1711, %v1316
        %v1720 = vadd.f32 %v1716, %v1317
        %v1721 = vld [vmem:[%s13] sm:$0x1]
        %v1722 = vld [vmem:[%s14] sm:$0x1]
        %v1723 = vsel %vm588, %v1719, 0.0
        %1724 = vadd.xlane.f32.xlu0 %v1723
        %v1725 = vpop.xlane.xlu0 %1724
        %v1726 = vsel %vm588, %v1720, 0.0
        %1727 = vadd.xlane.f32.xlu0 %v1726
        %v1728 = vpop.xlane.xlu0 %1727
        %v1729 = vmul.f32 %v1725, %v1269
        %v1730 = vmul.f32 %v1728, %v1269
        %v1731 = vsub.f32 %v1719, %v1729
        %v1732 = vsub.f32 %v1720, %v1730
        %v1733 = vmul.f32 %v1731, %v1731
        %v1734 = vmul.f32 %v1732, %v1732
        %v1735 = vsel %vm588, %v1733, 0.0
        %1736 = vadd.xlane.f32.xlu0 %v1735
        %v1737 = vpop.xlane.xlu0 %1736
        %v1738 = vsel %vm588, %v1734, 0.0
        %1739 = vadd.xlane.f32.xlu0 %v1738
        %v1740 = vpop.xlane.xlu0 %1739
        %v1741 = vmul.f32 %v1737, %v1269
        %v1742 = vmul.f32 %v1740, %v1269
        %v1743 = vadd.f32 %v1741, 1e-05
        %v1744 = vadd.f32 %v1742, 1e-05
        %v1745 = vrsqrt.pop %v1743
        %v1746 = vrsqrt.pop %v1744
        %v1747 = vmul.f32 %v1731, %v1745
        %v1748 = vmul.f32 %v1732, %v1746
        %v1750 = vlaneseq
        %v1751 = vshrl.u32 %v1750, 7
        %v1752 = vsub.s32 0, %v1751
        %v1753 = vrot.slane %v1721, %v1752
        %v1755 = vmul.f32 %v1747, %v1753
        %v1756 = vmul.f32 %v1748, %v1753
        %v1758 = vlaneseq
        %v1759 = vshrl.u32 %v1758, 7
        %v1760 = vsub.s32 0, %v1759
        %v1761 = vrot.slane %v1722, %v1760
        %v1763 = vadd.f32 %v1755, %v1761
        %v1764 = vadd.f32 %v1756, %v1761
        %v1765 = vmul.f32 %v1763, %v1309
        %v1766 = vmul.f32 %v1764, %v1314
        %1767 = vst.msk [vmem:[%s548] sm:$0xff] %vm588, %v1765
        %1768 = vst.msk [vmem:[%s548 + $0x8] sm:$0xff] %vm588, %v1766
        %s1769 = sand.u32 %s372, 1
        %s1770 = scalar_lea.sflag [#allocation3], %s1769
        %s1771 = sand.u32 %s372, 1
        %s1772 = smul.addr %s1771, 16
        %s1773 = scalar_lea.vmem [#allocation2], %s1772
        %s1774 = sand.u32 %s398, 1
        %s1775 = scalar_lea.sflag [#allocation5], %s1774
        %s1776 = sand.u32 %s398, 1
        %s1777 = smul.addr %s1776, 32
        %s1778 = scalar_lea.vmem [#allocation4], %s1777
        // Predicated region
        $region81: #{tpu_custom_call.1} parent=79 // pred_check
          %p1779 = pneg %p382
        $region82: #{tpu_custom_call.1} parent=79 // pred_check_branch
          %1781 = sbr.rel (%p1779) target = $region84
        $region83: #{tpu_custom_call.1} parent=79 // pred_region
          %s1783 = ssub.s32 256, 256
          %1784 = vsyncadd %s1770, %s1783
          %s1785 = smul.addr %s34, 2
          %s1786 = smul.addr %s1785, 128
          %s1787 = scalar_lea.hbm %s15, %s1786
          %s1788 = sshll.u32 %s1773, 4
          %s1789 = int_to_ptr.vmem [resolvable:$true] %s1788
          %1794 = dma.vmem_to_hbm [thread:$0]  %s1789, 256, %s1787, %s1770, 128, 128, 8
        $region84: #{tpu_custom_call.1} parent=79 // pred_fallthru
          _
        // Predicated region
        $region85: #{tpu_custom_call.1} parent=79 // pred_check
          %p1795 = pneg %p408
        $region86: #{tpu_custom_call.1} parent=79 // pred_check_branch
          %1797 = sbr.rel (%p1795) target = $region88
        $region87: #{tpu_custom_call.1} parent=79 // pred_region
          #allocation7 [shape = 'u32[6]{0}', space=smem, size = 0x18, scoped, tag = 'DMA stride descriptor']
          %s1799 = ssub.s32 512, 512
          %1800 = vsyncadd %s1775, %s1799
          %s1801 = smul.addr %s34, 2
          %s1802 = smul.addr %s1801, 128
          %s1803 = scalar_lea.hbm %s16, %s1802
          %s1805 = sshll.u32 1, 14
          %s1806 = sxor.u32 4294967295, %s1805
          %s1809 = sshll.u32 7, 18
          %s1810 = sxor.u32 4294967295, %s1809
          %s1811 = sand.u32 0, %s1810
          %s1813 = sor.u32 %s1811, 0
          %s1815 = sshll.u32 3, 24
          %s1816 = sxor.u32 4294967295, %s1815
          %s1817 = sand.u32 %s1813, %s1816
          %s1819 = sor.u32 %s1817, 0
          %s1820 = sshll.u32 %s1778, 4
          %s1821 = int_to_ptr.vmem [resolvable:$true] %s1820
          %1827 = sst [smem:[#allocation7]] 256
          %s1828 = scalar_lea.smem [#allocation7], 1
          %1829 = sst [smem:[%s1828]] 512
          %s1830 = scalar_lea.smem [#allocation7], 2
          %1831 = sst [smem:[%s1830]] 2
          %s1832 = scalar_lea.smem [#allocation7], 3
          %1833 = sst [smem:[%s1832]] 128
          %s1834 = scalar_lea.smem [#allocation7], 4
          %1835 = sst [smem:[%s1834]] 128
          %s1836 = scalar_lea.smem [#allocation7], 5
          %1837 = sst [smem:[%s1836]] 8
          %1839 = dma.general %s1821, 512, %s1803, %s1775, [#allocation6], [#allocation7], %s1819, 0
        $region88: #{tpu_custom_call.1} parent=79 // pred_fallthru
          _
      $region80: #{tpu_custom_call.1} parent=5 // pred_fallthru
        _
      %p1840 = scmp.le.s32.totalorder 2, %s29
      // Predicated region
      $region89: #{tpu_custom_call.1} parent=5 // pred_check
        %p1841 = pneg %p1840
      $region90: #{tpu_custom_call.1} parent=5 // pred_check_branch
        %1843 = sbr.rel (%p1841) target = $region92
      $region91: #{tpu_custom_call.1} parent=5 // pred_region
        %s1844 = ssub.s32 %s29, 2
        // Predicated region
        $region93: #{tpu_custom_call.1} parent=91 // pred_check
          %p1845 = pneg %p388
        $region94: #{tpu_custom_call.1} parent=91 // pred_check_branch
          %1847 = sbr.rel (%p1845) target = $region96
        $region95: #{tpu_custom_call.1} parent=91 // pred_region
          %s1848 = sand.u32 %s373, 1
          %s1849 = scalar_lea.sflag [#allocation3], %s1848
          %s1850 = sand.u32 %s373, 1
          %s1851 = smul.addr %s1850, 16
          %s1852 = scalar_lea.vmem [#allocation2], %s1851
          %1853 = dma.done %s1849, 256
        $region96: #{tpu_custom_call.1} parent=91 // pred_fallthru
          _
        // Predicated region
        $region97: #{tpu_custom_call.1} parent=91 // pred_check
          %p1854 = pneg %p414
        $region98: #{tpu_custom_call.1} parent=91 // pred_check_branch
          %1856 = sbr.rel (%p1854) target = $region100
        $region99: #{tpu_custom_call.1} parent=91 // pred_region
          %s1857 = sand.u32 %s399, 1
          %s1858 = scalar_lea.sflag [#allocation5], %s1857
          %s1859 = sand.u32 %s399, 1
          %s1860 = smul.addr %s1859, 32
          %s1861 = scalar_lea.vmem [#allocation4], %s1860
          %1862 = dma.done %s1858, 512
        $region100: #{tpu_custom_call.1} parent=91 // pred_fallthru
          _
      $region92: #{tpu_custom_call.1} parent=5 // pred_fallthru
        _
    $region6: #{tpu_custom_call.1} parent=1 // loop_footer
      %s33 = sadd.s32 1, %s29
    $region7: #{tpu_custom_call.1} parent=1 // loop_footer_branch
      %28 = sbr.rel target = $region3
    $region8: #{tpu_custom_call.1} parent=1 // loop_exit
      _
    %1863 = vsyncpa [#allocation3], 1
    %s1864 = scalar_lea.sflag [#allocation3], 1
    %1865 = vsyncpa %s1864, 1
    %1866 = vsyncpa [#allocation5], 1
    %s1867 = scalar_lea.sflag [#allocation5], 1
    %1868 = vsyncpa %s1867, 1

</llo_original>
